<compile_context>
chip_gen: v7x
topology: tpu7x:2x2x1
jax: 0.10.0
libtpu: 0.0.40
codegen_flags: <defaults>
</compile_context>

<pallas_src>
import functools

import jax
import jax.numpy as jnp
from jax.experimental import pallas as pl
from jax.experimental.pallas import tpu as pltpu

# ---- module hyper-parameters (small, consistent with the nn.Module) ----
DIM = 32          # model dim
HEADS = 4         # heads
DIM_HEAD = 16     # per-head dim
INNER = HEADS * DIM_HEAD          # 64
SCALE = DIM_HEAD ** (-0.5)        # 0.25 (exact power of two)
EPS = 1e-5                        # nn.LayerNorm default


def attention_kernel(x_ref, ln_ref, wqkv_ref, wout_ref, o_ref, *, compute_dtype):
    """One batch-tile (BT batch elements) per grid step.

    x_ref     : (BT, N, DIM)           f32
    ln_ref    : (3, DIM)               rows = [gamma, beta, b_out] (f32)
    wqkv_ref  : (3*H, DIM, DIM_HEAD)   stacked per-head q|k|v weights
                                       (SCALE pre-folded into the q slabs)
    wout_ref  : (H, DIM_HEAD, DIM)     per-head output-projection weight
    o_ref     : (BT, N, DIM)           f32 output
    """
    bt, n, d_model = x_ref.shape
    hq, _, dh = wqkv_ref.shape          # hq = 3 * H
    h = hq // 3
    r = bt * n
    g = h * bt
    use_approx_recip = jnp.dtype(compute_dtype) != jnp.dtype(jnp.float32)

    # Flatten batch rows: (BT, N, D) -> (R, D)  (leading-dim merge, free).
    x = x_ref[...].reshape(r, d_model)

    gamma = ln_ref[0:1, :]
    beta = ln_ref[1:2, :]
    b_out = ln_ref[2:3, :]

    # ---- LayerNorm (f32, VPU + EUP rsqrt) ----
    mean = jnp.mean(x, axis=-1, keepdims=True)
    var = jnp.mean(jnp.square(x - mean), axis=-1, keepdims=True)
    xn = (x - mean) * jax.lax.rsqrt(var + EPS)
    xn = (xn * gamma + beta).astype(compute_dtype)               # (R, D)

    # ---- one batched head-major projection for all of Q/K/V (MXU) ----
    xn_b = jnp.broadcast_to(xn, (hq, r, d_model))                # hoisted once
    qkv = jnp.einsum('hrc,hcd->hrd', xn_b, wqkv_ref[...],
                     preferred_element_type=compute_dtype)       # (3H, R, dh)

    # Fold the batch tile into the head axis: leading-dim reshapes only (free);
    # each (head, batch-element) slice is an independent attention problem.
    qkv = qkv.reshape(3, h, bt, n, dh).reshape(3, g, n, dh)
    q, k, v = qkv[0], qkv[1], qkv[2]                             # leading-dim slices

    # ---- attention scores: contract shared last dim directly (no k.T) ----
    # SCALE is already folded into Wq, so no post-matmul scaling pass.
    scores = jnp.einsum('gnd,gmd->gnm', q, k,
                        preferred_element_type=jnp.float32)      # (G, N, N) f32

    # ---- softmax (f32 statistics) ----
    m = jnp.max(scores, axis=-1, keepdims=True)
    e = jnp.exp(scores - m)
    denom = jnp.sum(e, axis=-1, keepdims=True)
    p = (e * pl.reciprocal(denom, approx=use_approx_recip)).astype(compute_dtype)

    # ---- attention-weighted values ----
    out = jnp.einsum('gnm,gmd->gnd', p, v,
                     preferred_element_type=compute_dtype)       # (G, N, dh)

    # ---- output projection: per-head project then sum over heads ----
    # (equivalent to 'b h n d -> b n (h d)' concat followed by (R,INNER)@(INNER,D))
    out = out.reshape(h, bt, n, dh).reshape(h, r, dh)            # (H, R, dh)
    proj = jnp.einsum('hrd,hdc->hrc', out, wout_ref[...],
                      preferred_element_type=jnp.float32)        # (H, R, D)
    y = jnp.sum(proj, axis=0) + b_out                            # (R, D) f32

    o_ref[...] = y.reshape(bt, n, d_model)


@functools.partial(jax.jit, static_argnames=("compute_dtype",))
def attention_forward(x, gamma, beta, w_qkv, w_out, b_out, *,
                      compute_dtype=jnp.bfloat16):
    B, N, D = x.shape
    assert D == DIM

    # Wrapper-side weight re-layout (plain XLA, outside the kernel):
    # split the fused qkv weight, make every projection head-major, fold the
    # exact power-of-two softmax scale into Wq, and stack into one slab so the
    # kernel issues a single batched MXU projection.
    wq, wk, wv = jnp.split(w_qkv, 3, axis=-1)                    # each (D, INNER)

    def to_heads(w):                                             # (D, H*dh) -> (H, D, dh)
        return w.reshape(D, HEADS, DIM_HEAD).transpose(1, 0, 2)

    wqkv_h = jnp.stack([to_heads(wq) * SCALE, to_heads(wk), to_heads(wv)], axis=0)
    wqkv_h = wqkv_h.reshape(3 * HEADS, D, DIM_HEAD).astype(compute_dtype)
    wout_h = w_out.reshape(HEADS, DIM_HEAD, D).astype(compute_dtype)   # (H, dh, D)

    # Pack the three tiny (1, D) vectors into one (3, D) ref (fewer DMAs/args).
    ln_params = jnp.concatenate(
        [gamma.reshape(1, D), beta.reshape(1, D), b_out.reshape(1, D)],
        axis=0).astype(jnp.float32)                                    # (3, D)

    # Collapse the grid to at most 2 parallel steps: many batch rows per step
    # (amortizes ~0.35us/step overhead) while still feeding both v7x TensorCores.
    G = 2 if (B >= 2 and B % 2 == 0) else 1
    BT = B // G

    kernel = functools.partial(attention_kernel, compute_dtype=compute_dtype)

    flops = int(2 * B * N * DIM * 3 * INNER                  # q/k/v projections
                + 2 * 2 * B * HEADS * N * N * DIM_HEAD       # qk^T and pv
                + 2 * B * N * INNER * DIM)                   # output projection
    transcendentals = int(B * HEADS * N * N + B * N)
    bytes_accessed = int(4 * (2 * B * N * DIM + ln_params.size)
                         + jnp.dtype(compute_dtype).itemsize * (w_qkv.size + w_out.size))

    return pl.pallas_call(
        kernel,
        out_shape=jax.ShapeDtypeStruct((B, N, D), jnp.float32),
        grid=(G,),
        in_specs=[
            pl.BlockSpec((BT, N, D), lambda g: (g, 0, 0)),               # x batch tile
            pl.BlockSpec((3, D), lambda g: (0, 0)),                      # gamma/beta/b_out
            pl.BlockSpec((3 * HEADS, D, DIM_HEAD), lambda g: (0, 0, 0)), # Wq|Wk|Wv (head-major)
            pl.BlockSpec((HEADS, DIM_HEAD, D), lambda g: (0, 0, 0)),     # Wout (head-major)
        ],
        out_specs=pl.BlockSpec((BT, N, D), lambda g: (g, 0, 0)),
        compiler_params=pltpu.CompilerParams(
            dimension_semantics=("parallel",)),
        cost_estimate=pl.CostEstimate(flops=flops,
                                      transcendentals=transcendentals,
                                      bytes_accessed=bytes_accessed),
    )(x, ln_params, wqkv_h, wout_h)


def reference_forward(x, gamma, beta, w_qkv, w_out, b_out):
    """Plain-JAX f32 reference mirroring the PyTorch forward."""
    mean = jnp.mean(x, axis=-1, keepdims=True)
    var = jnp.mean(jnp.square(x - mean), axis=-1, keepdims=True)
    xn = (x - mean) / jnp.sqrt(var + EPS) * gamma + beta
    qkv = xn @ w_qkv                                    # (B, N, 3*INNER)
    q, k, v = jnp.split(qkv, 3, axis=-1)

    def to_heads(t):
        B, N, _ = t.shape
        return t.reshape(B, N, HEADS, DIM_HEAD).transpose(0, 2, 1, 3)

    q, k, v = map(to_heads, (q, k, v))                  # (B, H, N, d)
    dots = jnp.einsum('bhnd,bhmd->bhnm', q, k) * SCALE
    attn = jax.nn.softmax(dots, axis=-1)
    out = jnp.einsum('bhnm,bhmd->bhnd', attn, v)
    out = out.transpose(0, 2, 1, 3).reshape(x.shape[0], x.shape[1], INNER)
    return out @ w_out + b_out


if __name__ == "__main__":
    B, N = 2, 8
    key = jax.random.PRNGKey(0)
    kx, kqkv, kout, kbias = jax.random.split(key, 4)

    x = jax.random.normal(kx, (B, N, DIM), dtype=jnp.float32)

    # Deterministic parameter init (LayerNorm: ones/zeros like PyTorch default).
    gamma = jnp.ones((1, DIM), dtype=jnp.float32)
    beta = jnp.zeros((1, DIM), dtype=jnp.float32)
    # torch Linear stores weight as (out, in) and computes x @ W.T;
    # here we store the transposed (in, out) layout directly.
    w_qkv = jax.random.normal(kqkv, (DIM, 3 * INNER), dtype=jnp.float32) * 0.05
    w_out = jax.random.normal(kout, (INNER, DIM), dtype=jnp.float32) * 0.05
    b_out = jax.random.normal(kbias, (1, DIM), dtype=jnp.float32) * 0.05

    ref = reference_forward(x, gamma, beta, w_qkv, w_out, b_out)

    # Strict check: f32 MXU operands (exact-semantics path).
    out_f32 = jax.block_until_ready(
        attention_forward(x, gamma, beta, w_qkv, w_out, b_out,
                          compute_dtype=jnp.float32))
    assert out_f32.shape == (B, N, DIM)
    assert jnp.allclose(out_f32, ref, atol=1e-4, rtol=1e-4), "f32 mismatch vs reference"

    # Perf path: bf16 MXU operands (f32 LayerNorm/softmax stats) — looser tolerance.
    out_bf16 = jax.block_until_ready(
        attention_forward(x, gamma, beta, w_qkv, w_out, b_out,
                          compute_dtype=jnp.bfloat16))
    assert out_bf16.shape == (B, N, DIM)
    assert jnp.allclose(out_bf16, ref, atol=3e-2, rtol=3e-2), "bf16 mismatch vs reference"

    print("KERNEL_OK")
</pallas_src>

<mosaic_0001>
module attributes {stable_mosaic.version = 11 : i64} {
  func.func @attention_kernel(%arg0: i32, %arg1: memref<1x8x32xf32, #tpu.memory_space<vmem>>, %arg2: memref<3x32xf32, #tpu.memory_space<vmem>>, %arg3: memref<12x32x16xf32, #tpu.memory_space<vmem>>, %arg4: memref<4x16x32xf32, #tpu.memory_space<vmem>>, %arg5: memref<1x8x32xf32, #tpu.memory_space<vmem>>) attributes {dimension_semantics = [#tpu.dimension_semantics<parallel>], iteration_bounds = array<i64: 2>, scalar_prefetch = 0 : i64, scratch_operands = 0 : i64, tpu.core_type = #tpu.core_type<tc>, window_params = [{transform_indices = @transform_0, window_bounds = array<i64: 1, 8, 32>}, {pipeline_mode = #tpu.pipeline_mode<synchronous>, transform_indices = @transform_1, window_bounds = array<i64: 3, 32>}, {pipeline_mode = #tpu.pipeline_mode<synchronous>, transform_indices = @transform_2, window_bounds = array<i64: 12, 32, 16>}, {pipeline_mode = #tpu.pipeline_mode<synchronous>, transform_indices = @transform_3, window_bounds = array<i64: 4, 16, 32>}, {transform_indices = @transform_4, window_bounds = array<i64: 1, 8, 32>}]} {
    %c0 = arith.constant 0 : index
    %c0_0 = arith.constant 0 : index
    %c0_1 = arith.constant 0 : index
    %0 = vector.load %arg1[%c0, %c0_0, %c0_1] : memref<1x8x32xf32, #tpu.memory_space<vmem>>, vector<1x8x32xf32>
    %1 = vector.shape_cast %0 : vector<1x8x32xf32> to vector<8x32xf32>
    %c0_2 = arith.constant 0 : index
    %c0_3 = arith.constant 0 : index
    %2 = vector.load %arg2[%c0_2, %c0_3] : memref<3x32xf32, #tpu.memory_space<vmem>>, vector<1x32xf32>
    %c1 = arith.constant 1 : index
    %c0_4 = arith.constant 0 : index
    %3 = vector.load %arg2[%c1, %c0_4] : memref<3x32xf32, #tpu.memory_space<vmem>>, vector<1x32xf32>
    %c2 = arith.constant 2 : index
    %c0_5 = arith.constant 0 : index
    %4 = vector.load %arg2[%c2, %c0_5] : memref<3x32xf32, #tpu.memory_space<vmem>>, vector<1x32xf32>
    %cst = arith.constant dense<0.000000e+00> : vector<8xf32>
    %5 = vector.multi_reduction <add>, %1, %cst [1] : vector<8x32xf32> to vector<8xf32>
    %6 = vector.shape_cast %5 : vector<8xf32> to vector<8x1xf32>
    %cst_6 = arith.constant 3.200000e+01 : f32
    %7 = vector.broadcast %cst_6 : f32 to vector<8x1xf32>
    %8 = arith.divf %6, %7 : vector<8x1xf32>
    %9 = vector.broadcast %8 : vector<8x1xf32> to vector<8x32xf32>
    %10 = arith.subf %1, %9 : vector<8x32xf32>
    %11 = arith.mulf %10, %10 : vector<8x32xf32>
    %cst_7 = arith.constant dense<0.000000e+00> : vector<8xf32>
    %12 = vector.multi_reduction <add>, %11, %cst_7 [1] : vector<8x32xf32> to vector<8xf32>
    %13 = vector.shape_cast %12 : vector<8xf32> to vector<8x1xf32>
    %cst_8 = arith.constant 3.200000e+01 : f32
    %14 = vector.broadcast %cst_8 : f32 to vector<8x1xf32>
    %15 = arith.divf %13, %14 : vector<8x1xf32>
    %16 = vector.broadcast %8 : vector<8x1xf32> to vector<8x32xf32>
    %17 = arith.subf %1, %16 : vector<8x32xf32>
    %cst_9 = arith.constant 9.99999974E-6 : f32
    %18 = vector.broadcast %cst_9 : f32 to vector<8x1xf32>
    %19 = arith.addf %15, %18 : vector<8x1xf32>
    %20 = math.rsqrt %19 : vector<8x1xf32>
    %21 = vector.broadcast %20 : vector<8x1xf32> to vector<8x32xf32>
    %22 = arith.mulf %17, %21 : vector<8x32xf32>
    %23 = vector.broadcast %2 : vector<1x32xf32> to vector<8x32xf32>
    %24 = arith.mulf %22, %23 : vector<8x32xf32>
    %25 = vector.broadcast %3 : vector<1x32xf32> to vector<8x32xf32>
    %26 = arith.addf %24, %25 : vector<8x32xf32>
    %27 = vector.shape_cast %26 : vector<8x32xf32> to vector<1x8x32xf32>
    %28 = vector.broadcast %27 : vector<1x8x32xf32> to vector<12x8x32xf32>
    %c0_10 = arith.constant 0 : index
    %c0_11 = arith.constant 0 : index
    %c0_12 = arith.constant 0 : index
    %29 = vector.load %arg3[%c0_10, %c0_11, %c0_12] : memref<12x32x16xf32, #tpu.memory_space<vmem>>, vector<12x32x16xf32>
    "tpu.trace_start"() <{level = 10 : i32, message = "hrc,hcd->hrd"}> : () -> ()
    %cst_13 = arith.constant dense<0.000000e+00> : vector<12x8x16xf32>
    %30 = tpu.matmul %28, %29, %cst_13 {dimension_numbers = #tpu.dot_dimension_numbers<[2], [1], [1], [2], [0, 0, 0, 1, 1, 2], [0], [0]>} : vector<12x8x32xf32>, vector<12x32x16xf32>, vector<12x8x16xf32> -> vector<12x8x16xf32>
    "tpu.trace_stop"() : () -> ()
    %31 = vector.shape_cast %30 : vector<12x8x16xf32> to vector<3x4x1x8x16xf32>
    %32 = vector.shape_cast %31 : vector<3x4x1x8x16xf32> to vector<3x4x8x16xf32>
    %33 = vector.extract_strided_slice %32 {offsets = [0, 0, 0, 0], sizes = [1, 4, 8, 16], strides = [1, 1, 1, 1]} : vector<3x4x8x16xf32> to vector<1x4x8x16xf32>
    %34 = vector.shape_cast %33 : vector<1x4x8x16xf32> to vector<4x8x16xf32>
    %35 = vector.extract_strided_slice %32 {offsets = [1, 0, 0, 0], sizes = [1, 4, 8, 16], strides = [1, 1, 1, 1]} : vector<3x4x8x16xf32> to vector<1x4x8x16xf32>
    %36 = vector.shape_cast %35 : vector<1x4x8x16xf32> to vector<4x8x16xf32>
    %37 = vector.extract_strided_slice %32 {offsets = [2, 0, 0, 0], sizes = [1, 4, 8, 16], strides = [1, 1, 1, 1]} : vector<3x4x8x16xf32> to vector<1x4x8x16xf32>
    %38 = vector.shape_cast %37 : vector<1x4x8x16xf32> to vector<4x8x16xf32>
    "tpu.trace_start"() <{level = 10 : i32, message = "gnd,gmd->gnm"}> : () -> ()
    %cst_14 = arith.constant dense<0.000000e+00> : vector<4x8x8xf32>
    %39 = tpu.matmul %34, %36, %cst_14 {dimension_numbers = #tpu.dot_dimension_numbers<[2], [2], [1], [1], [0, 0, 0, 1, 1, 1], [0], [0]>} : vector<4x8x16xf32>, vector<4x8x16xf32>, vector<4x8x8xf32> -> vector<4x8x8xf32>
    "tpu.trace_stop"() : () -> ()
    %cst_15 = arith.constant dense<0xFF800000> : vector<4x8xf32>
    %40 = vector.multi_reduction <maximumf>, %39, %cst_15 [2] : vector<4x8x8xf32> to vector<4x8xf32>
    %41 = vector.shape_cast %40 : vector<4x8xf32> to vector<4x8x1xf32>
    %42 = vector.broadcast %41 : vector<4x8x1xf32> to vector<4x8x8xf32>
    %43 = arith.subf %39, %42 : vector<4x8x8xf32>
    %44 = math.exp %43 : vector<4x8x8xf32>
    %cst_16 = arith.constant dense<0.000000e+00> : vector<4x8xf32>
    %45 = vector.multi_reduction <add>, %44, %cst_16 [2] : vector<4x8x8xf32> to vector<4x8xf32>
    %46 = vector.shape_cast %45 : vector<4x8xf32> to vector<4x8x1xf32>
    %47 = tpu.reciprocal %46 : vector<4x8x1xf32> -> vector<4x8x1xf32>
    %48 = vector.broadcast %47 : vector<4x8x1xf32> to vector<4x8x8xf32>
    %49 = arith.mulf %44, %48 : vector<4x8x8xf32>
    "tpu.trace_start"() <{level = 10 : i32, message = "gnm,gmd->gnd"}> : () -> ()
    %cst_17 = arith.constant dense<0.000000e+00> : vector<4x8x16xf32>
    %50 = tpu.matmul %49, %38, %cst_17 {dimension_numbers = #tpu.dot_dimension_numbers<[2], [1], [1], [2], [0, 0, 0, 1, 1, 2], [0], [0]>} : vector<4x8x8xf32>, vector<4x8x16xf32>, vector<4x8x16xf32> -> vector<4x8x16xf32>
    "tpu.trace_stop"() : () -> ()
    %51 = vector.shape_cast %50 : vector<4x8x16xf32> to vector<4x1x8x16xf32>
    %52 = vector.shape_cast %51 : vector<4x1x8x16xf32> to vector<4x8x16xf32>
    %c0_18 = arith.constant 0 : index
    %c0_19 = arith.constant 0 : index
    %c0_20 = arith.constant 0 : index
    %53 = vector.load %arg4[%c0_18, %c0_19, %c0_20] : memref<4x16x32xf32, #tpu.memory_space<vmem>>, vector<4x16x32xf32>
    "tpu.trace_start"() <{level = 10 : i32, message = "hrd,hdc->hrc"}> : () -> ()
    %cst_21 = arith.constant dense<0.000000e+00> : vector<4x8x32xf32>
    %54 = tpu.matmul %52, %53, %cst_21 {dimension_numbers = #tpu.dot_dimension_numbers<[2], [1], [1], [2], [0, 0, 0, 1, 1, 2], [0], [0]>} : vector<4x8x16xf32>, vector<4x16x32xf32>, vector<4x8x32xf32> -> vector<4x8x32xf32>
    "tpu.trace_stop"() : () -> ()
    %cst_22 = arith.constant dense<0.000000e+00> : vector<8x32xf32>
    %55 = vector.multi_reduction <add>, %54, %cst_22 [0] : vector<4x8x32xf32> to vector<8x32xf32>
    %56 = vector.broadcast %4 : vector<1x32xf32> to vector<8x32xf32>
    %57 = arith.addf %55, %56 : vector<8x32xf32>
    %58 = vector.shape_cast %57 : vector<8x32xf32> to vector<1x8x32xf32>
    %c0_23 = arith.constant 0 : index
    %c0_24 = arith.constant 0 : index
    %c0_25 = arith.constant 0 : index
    %59 = vector.load %arg5[%c0_23, %c0_24, %c0_25] : memref<1x8x32xf32, #tpu.memory_space<vmem>>, vector<1x8x32xf32>
    tpu.vector_store %arg5[%c0_23, %c0_24, %c0_25], %58 {strides = array<i32>} : memref<1x8x32xf32, #tpu.memory_space<vmem>>, vector<1x8x32xf32>,
    return
  }
  func.func @transform_0(%arg0: i32) -> (i32, i32, i32) {
    %c0_i32 = arith.constant 0 : i32
    %c0_i32_0 = arith.constant 0 : i32
    %c0_i32_1 = arith.constant 0 : i32
    return %arg0, %c0_i32, %c0_i32_0 : i32, i32, i32
  }
  func.func @transform_1(%arg0: i32) -> (i32, i32) {
    %c0_i32 = arith.constant 0 : i32
    %c0_i32_0 = arith.constant 0 : i32
    %c0_i32_1 = arith.constant 0 : i32
    return %c0_i32, %c0_i32_0 : i32, i32
  }
  func.func @transform_2(%arg0: i32) -> (i32, i32, i32) {
    %c0_i32 = arith.constant 0 : i32
    %c0_i32_0 = arith.constant 0 : i32
    %c0_i32_1 = arith.constant 0 : i32
    %c0_i32_2 = arith.constant 0 : i32
    return %c0_i32, %c0_i32_0, %c0_i32_1 : i32, i32, i32
  }
  func.func @transform_3(%arg0: i32) -> (i32, i32, i32) {
    %c0_i32 = arith.constant 0 : i32
    %c0_i32_0 = arith.constant 0 : i32
    %c0_i32_1 = arith.constant 0 : i32
    %c0_i32_2 = arith.constant 0 : i32
    return %c0_i32, %c0_i32_0, %c0_i32_1 : i32, i32, i32
  }
  func.func @transform_4(%arg0: i32) -> (i32, i32, i32) {
    %c0_i32 = arith.constant 0 : i32
    %c0_i32_0 = arith.constant 0 : i32
    %c0_i32_1 = arith.constant 0 : i32
    return %arg0, %c0_i32, %c0_i32_0 : i32, i32, i32
  }
}

</mosaic_0001>

<llo_original>
// kernel: attention_forward.1
$region0: #{attention_forward.1}
  #allocation0 [shape = 'u32[]', space=smem, size = 0x4, offset = 0x4, fixed_abs, tag = 'smem constant byte address 0x4 - core index']
  #allocation1 [shape = 'u32[144,128]{1,0:T(1,128)}', space=vmem, size = 0x12000, scoped, tag = 'internal scratch']
  %s0 = inlined_call_operand.vmem [shape: f32[2,8,32], index: 0, kind: input, shape index: {}]
  %s1 = inlined_call_operand.vmem [shape: f32[3,32], index: 1, kind: input, shape index: {}]
  %s2 = inlined_call_operand.vmem [shape: f32[12,32,16], index: 2, kind: input, shape index: {}]
  %s3 = inlined_call_operand.vmem [shape: f32[4,16,32], index: 3, kind: input, shape index: {}]
  %s4 = inlined_call_operand.hbm [shape: f32[2,8,32], index: 4, kind: output, shape index: {}]
  %s5 = sld [smem:[#allocation0]]
  $region49: #{attention_forward.1} parent=0
    _
  %s7 = ssub.s32 1, %s5
  %s8 = scalar_select 0, %s7, %s5
  $region1: #{attention_forward.1} parent=0
    #allocation2 [shape = 'u8[8192]{0}', space=vmem, size = 0x2000, scoped, tag = 'output window, operand 0']
    #allocation3 [shape = 's32[2]{0}', space=sflag, size = 0x8, scoped, tag = 'scoped memory for attention_forward.1']
    %9 = vsyncpa [#allocation3], 0
    %s10 = scalar_lea.sflag [#allocation3], 1
    %11 = vsyncpa %s10, 0
    loop: start=0, step=1, limit=4
    $region2: #{attention_forward.1} parent=1 // loop_pre_header
      _
    $region3: #{attention_forward.1} parent=1 // loop_header
      %s13 = sphi 0, %s17
      %p14 = scmp.ge.s32.totalorder %s13, 4
      %s23 = sphi 0, %s25
      %s26 = sphi 0, %s23
      %s27 = sphi 0, %s26
      %s43 = sphi 0, %s27
      %s47 = sphi 0, %s47
      %s49 = sphi 0, %s47
      %s50 = sphi 0, %s49
      %s64 = sphi 0, %s50
      %s68 = sphi 0, %s68
      %s70 = sphi 0, %s68
      %s71 = sphi 0, %s70
      %s85 = sphi 0, %s71
      %s89 = sphi 0, %s89
      %s91 = sphi 0, %s89
      %s92 = sphi 0, %s91
      %s106 = sphi 0, %s92
      %s112 = sphi 0, %s114
      %s115 = sphi 0, %s112
      %s116 = sphi 0, %s115
      %s132 = sphi 0, %s116
    $region4: #{attention_forward.1} parent=1 // loop_header_branch
      %16 = sbr.rel (%p14) target = $region8
    $region5: #{attention_forward.1} parent=1 // loop_body
      %s18 = ssub.s32 %s13, 1
      %s19 = ssub.s32 %s13, 2
      %s20 = sadd.s32 %s13, 1
      %s21 = ssub.s32 %s13, %s20
      %p22 = scmp.eq.s32.totalorder %s21, 0
      %s24 = sadd.s32 %s23, 1
      %s25 = scalar_select %p22, %s23, %s24
      %p28 = pneg %p22
      %p29 = scmp.eq.s32.totalorder %s13, 1
      %p30 = por %p28, %p29
      %p31 = scmp.ne.s32.totalorder %s23, %s26
      %p32 = scmp.eq.s32.totalorder %s13, 0
      %p33 = por %p31, %p32
      %p34 = scmp.ne.s32.totalorder %s23, %s26
      %p35 = scmp.eq.s32.totalorder %s18, 1
      %p36 = por %p34, %p35
      %p37 = scmp.ne.s32.totalorder %s26, %s27
      %p38 = scmp.eq.s32.totalorder %s18, 0
      %p39 = por %p37, %p38
      %p40 = scmp.ne.s32.totalorder %s26, %s27
      %p41 = scmp.eq.s32.totalorder %s19, 1
      %p42 = por %p40, %p41
      %p44 = scmp.ne.s32.totalorder %s27, %s43
      %p45 = scmp.eq.s32.totalorder %s19, 0
      %p46 = por %p44, %p45
      %s48 = sadd.s32 %s47, 1
      %p51 = scmp.eq.s32.totalorder %s13, 1
      %p52 = scmp.ne.s32.totalorder %s47, %s49
      %p53 = scmp.eq.s32.totalorder %s13, 0
      %p54 = por %p52, %p53
      %p55 = scmp.ne.s32.totalorder %s47, %s49
      %p56 = scmp.eq.s32.totalorder %s18, 1
      %p57 = por %p55, %p56
      %p58 = scmp.ne.s32.totalorder %s49, %s50
      %p59 = scmp.eq.s32.totalorder %s18, 0
      %p60 = por %p58, %p59
      %p61 = scmp.ne.s32.totalorder %s49, %s50
      %p62 = scmp.eq.s32.totalorder %s19, 1
      %p63 = por %p61, %p62
      %p65 = scmp.ne.s32.totalorder %s50, %s64
      %p66 = scmp.eq.s32.totalorder %s19, 0
      %p67 = por %p65, %p66
      %s69 = sadd.s32 %s68, 1
      %p72 = scmp.eq.s32.totalorder %s13, 1
      %p73 = scmp.ne.s32.totalorder %s68, %s70
      %p74 = scmp.eq.s32.totalorder %s13, 0
      %p75 = por %p73, %p74
      %p76 = scmp.ne.s32.totalorder %s68, %s70
      %p77 = scmp.eq.s32.totalorder %s18, 1
      %p78 = por %p76, %p77
      %p79 = scmp.ne.s32.totalorder %s70, %s71
      %p80 = scmp.eq.s32.totalorder %s18, 0
      %p81 = por %p79, %p80
      %p82 = scmp.ne.s32.totalorder %s70, %s71
      %p83 = scmp.eq.s32.totalorder %s19, 1
      %p84 = por %p82, %p83
      %p86 = scmp.ne.s32.totalorder %s71, %s85
      %p87 = scmp.eq.s32.totalorder %s19, 0
      %p88 = por %p86, %p87
      %s90 = sadd.s32 %s89, 1
      %p93 = scmp.eq.s32.totalorder %s13, 1
      %p94 = scmp.ne.s32.totalorder %s89, %s91
      %p95 = scmp.eq.s32.totalorder %s13, 0
      %p96 = por %p94, %p95
      %p97 = scmp.ne.s32.totalorder %s89, %s91
      %p98 = scmp.eq.s32.totalorder %s18, 1
      %p99 = por %p97, %p98
      %p100 = scmp.ne.s32.totalorder %s91, %s92
      %p101 = scmp.eq.s32.totalorder %s18, 0
      %p102 = por %p100, %p101
      %p103 = scmp.ne.s32.totalorder %s91, %s92
      %p104 = scmp.eq.s32.totalorder %s19, 1
      %p105 = por %p103, %p104
      %p107 = scmp.ne.s32.totalorder %s92, %s106
      %p108 = scmp.eq.s32.totalorder %s19, 0
      %p109 = por %p107, %p108
      %s110 = ssub.s32 %s13, %s20
      %p111 = scmp.eq.s32.totalorder %s110, 0
      %s113 = sadd.s32 %s112, 1
      %s114 = scalar_select %p111, %s112, %s113
      %p117 = pneg %p111
      %p118 = scmp.eq.s32.totalorder %s13, 1
      %p119 = por %p117, %p118
      %p120 = scmp.ne.s32.totalorder %s112, %s115
      %p121 = scmp.eq.s32.totalorder %s13, 0
      %p122 = por %p120, %p121
      %p123 = scmp.ne.s32.totalorder %s112, %s115
      %p124 = scmp.eq.s32.totalorder %s18, 1
      %p125 = por %p123, %p124
      %p126 = scmp.ne.s32.totalorder %s115, %s116
      %p127 = scmp.eq.s32.totalorder %s18, 0
      %p128 = por %p126, %p127
      %p129 = scmp.ne.s32.totalorder %s115, %s116
      %p130 = scmp.eq.s32.totalorder %s19, 1
      %p131 = por %p129, %p130
      %p133 = scmp.ne.s32.totalorder %s116, %s132
      %p134 = scmp.eq.s32.totalorder %s19, 0
      %p135 = por %p133, %p134
      %p136 = scmp.le.s32.totalorder 1, %s13
      %p137 = scmp.lt.s32.totalorder %s13, 3
      %p138 = pnand %p136, %p137
      %p139 = pneg %p138
      // Predicated region
      $region9: #{attention_forward.1} parent=5 // pred_check
        _
      $region10: #{attention_forward.1} parent=5 // pred_check_branch
        %141 = sbr.rel (%p138) target = $region12
      $region11: #{attention_forward.1} parent=5 // pred_region
        %s142 = ssub.s32 %s13, 1
        // Predicated region
        $region13: #{attention_forward.1} parent=11 // pred_check
          %p143 = pneg %p60
        $region14: #{attention_forward.1} parent=11 // pred_check_branch
          %145 = sbr.rel (%p143) target = $region16
        $region15: #{attention_forward.1} parent=11 // pred_region
          _
        $region16: #{attention_forward.1} parent=11 // pred_fallthru
          _
        // Predicated region
        $region17: #{attention_forward.1} parent=11 // pred_check
          %p146 = pneg %p81
        $region18: #{attention_forward.1} parent=11 // pred_check_branch
          %148 = sbr.rel (%p146) target = $region20
        $region19: #{attention_forward.1} parent=11 // pred_region
          _
        $region20: #{attention_forward.1} parent=11 // pred_fallthru
          _
        // Predicated region
        $region21: #{attention_forward.1} parent=11 // pred_check
          %p149 = pneg %p102
        $region22: #{attention_forward.1} parent=11 // pred_check_branch
          %151 = sbr.rel (%p149) target = $region24
        $region23: #{attention_forward.1} parent=11 // pred_region
          _
        $region24: #{attention_forward.1} parent=11 // pred_fallthru
          _
      $region12: #{attention_forward.1} parent=5 // pred_fallthru
        _
      %p152 = scmp.lt.s32.totalorder %s13, 2
      // Predicated region
      $region25: #{attention_forward.1} parent=5 // pred_check
        %p153 = pneg %p152
      $region26: #{attention_forward.1} parent=5 // pred_check_branch
        %155 = sbr.rel (%p153) target = $region28
      $region27: #{attention_forward.1} parent=5 // pred_region
        // Predicated region
        $region29: #{attention_forward.1} parent=27 // pred_check
          %p156 = pneg %p33
        $region30: #{attention_forward.1} parent=27 // pred_check_branch
          %158 = sbr.rel (%p156) target = $region32
        $region31: #{attention_forward.1} parent=27 // pred_region
          %p159 = scmp.lt.s32.totalorder %s13, 1
          %s160 = scalar_select %p159, %s13, 1
          %s161 = smul.addr %s160, 8
          %s162 = scalar_lea.vmem %s0, %s161
        $region32: #{attention_forward.1} parent=27 // pred_fallthru
          _
      $region28: #{attention_forward.1} parent=5 // pred_fallthru
        _
      %p163 = scmp.le.s32.totalorder 1, %s13
      %p164 = scmp.lt.s32.totalorder %s13, 3
      %p165 = pnand %p163, %p164
      %p166 = pneg %p165
      // Predicated region
      $region33: #{attention_forward.1} parent=5 // pred_check
        _
      $region34: #{attention_forward.1} parent=5 // pred_check_branch
        %168 = sbr.rel (%p165) target = $region36
      $region35: #{attention_forward.1} parent=5 // pred_region
        %s169 = ssub.s32 %s13, 1
        %p170 = scmp.lt.s32.totalorder %s18, 1
        %s171 = scalar_select %p170, %s18, 1
        %s172 = smul.addr %s171, 8
        %s173 = scalar_lea.vmem %s0, %s172
        %p174 = pneg %p39
        %p175 = pneg %p36
        %p176 = pneg %p60
        %p177 = pneg %p57
        %p178 = pneg %p81
        %p179 = pneg %p78
        %p180 = pneg %p102
        %p181 = pneg %p99
        %p182 = pneg %p128
        %p183 = pneg %p125
        %s184 = sand.u32 %s115, 1
        %s185 = scalar_lea.sflag [#allocation3], %s184
        %s186 = sand.u32 %s115, 1
        %s187 = smul.addr %s186, 8
        %s188 = scalar_lea.vmem [#allocation2], %s187
        %p189 = scmp.lt.s32.totalorder %s18, 1
        %s190 = scalar_select %p189, %s18, 1
        %s191 = smul.addr %s190, 8
        %s192 = scalar_lea.vmem %s0, %s191
        %v193 = vld [vmem:[%s192] sm:$0xff]
        %v194 = vld [vmem:[%s1] sm:$0x1]
        %v195 = vld [vmem:[%s1 + $0x1] sm:$0x1]
        %v196 = vld [vmem:[%s1 + $0x2] sm:$0x1]
        %vm197 = vcmask 261120
        %v198 = vsel %vm197, %v193, 0.0
        %199 = vadd.xlane.f32.xlu0 %v198
        %v200 = vpop.xlane.xlu0 %199
        %v201 = vrcp.pop 32.0
        %v202 = vmul.f32 %v200, %v201
        %v203 = vsub.f32 %v193, %v202
        %v204 = vmul.f32 %v203, %v203
        %v205 = vsel %vm197, %v204, 0.0
        %206 = vadd.xlane.f32.xlu0 %v205
        %v207 = vpop.xlane.xlu0 %206
        %v208 = vmul.f32 %v207, %v201
        %v209 = vadd.f32 %v208, 1e-05
        %v210 = vrsqrt.pop %v209
        %v211 = vmul.f32 %v203, %v210
        %v212 = vlaneseq
        %v213 = vshrl.u32 %v212, 7
        %v214 = vsub.s32 0, %v213
        %v215 = vrot.slane %v194, %v214
        %v216 = vmul.f32 %v211, %v215
        %v217 = vlaneseq
        %v218 = vshrl.u32 %v217, 7
        %v219 = vsub.s32 0, %v218
        %v220 = vrot.slane %v195, %v219
        %v221 = vadd.f32 %v216, %v220
        %v222 = vld [vmem:[%s2] sm:$0xff]
        %v223 = vld [vmem:[%s2 + $0x8] sm:$0xff]
        %v224 = vld [vmem:[%s2 + $0x10] sm:$0xff]
        %v225 = vld [vmem:[%s2 + $0x18] sm:$0xff]
        %v226 = vld [vmem:[%s2 + $0x20] sm:$0xff]
        %v227 = vld [vmem:[%s2 + $0x28] sm:$0xff]
        %v228 = vld [vmem:[%s2 + $0x30] sm:$0xff]
        %v229 = vld [vmem:[%s2 + $0x38] sm:$0xff]
        %v230 = vld [vmem:[%s2 + $0x40] sm:$0xff]
        %v231 = vld [vmem:[%s2 + $0x48] sm:$0xff]
        %v232 = vld [vmem:[%s2 + $0x50] sm:$0xff]
        %v233 = vld [vmem:[%s2 + $0x58] sm:$0xff]
        %v234 = vld [vmem:[%s2 + $0x60] sm:$0xff]
        %v235 = vld [vmem:[%s2 + $0x68] sm:$0xff]
        %v236 = vld [vmem:[%s2 + $0x70] sm:$0xff]
        %v237 = vld [vmem:[%s2 + $0x78] sm:$0xff]
        %v238 = vld [vmem:[%s2 + $0x80] sm:$0xff]
        %v239 = vld [vmem:[%s2 + $0x88] sm:$0xff]
        %v240 = vld [vmem:[%s2 + $0x90] sm:$0xff]
        %v241 = vld [vmem:[%s2 + $0x98] sm:$0xff]
        %v242 = vld [vmem:[%s2 + $0xa0] sm:$0xff]
        %v243 = vld [vmem:[%s2 + $0xa8] sm:$0xff]
        %v244 = vld [vmem:[%s2 + $0xb0] sm:$0xff]
        %v245 = vld [vmem:[%s2 + $0xb8] sm:$0xff]
        %v246 = vld [vmem:[%s2 + $0xc0] sm:$0xff]
        %v247 = vld [vmem:[%s2 + $0xc8] sm:$0xff]
        %v248 = vld [vmem:[%s2 + $0xd0] sm:$0xff]
        %v249 = vld [vmem:[%s2 + $0xd8] sm:$0xff]
        %v250 = vld [vmem:[%s2 + $0xe0] sm:$0xff]
        %v251 = vld [vmem:[%s2 + $0xe8] sm:$0xff]
        %v252 = vld [vmem:[%s2 + $0xf0] sm:$0xff]
        %v253 = vld [vmem:[%s2 + $0xf8] sm:$0xff]
        %v254 = vld [vmem:[%s2 + $0x100] sm:$0xff]
        %v255 = vld [vmem:[%s2 + $0x108] sm:$0xff]
        %v256 = vld [vmem:[%s2 + $0x110] sm:$0xff]
        %v257 = vld [vmem:[%s2 + $0x118] sm:$0xff]
        %v258 = vld [vmem:[%s2 + $0x120] sm:$0xff]
        %v259 = vld [vmem:[%s2 + $0x128] sm:$0xff]
        %v260 = vld [vmem:[%s2 + $0x130] sm:$0xff]
        %v261 = vld [vmem:[%s2 + $0x138] sm:$0xff]
        %v262 = vld [vmem:[%s2 + $0x140] sm:$0xff]
        %v263 = vld [vmem:[%s2 + $0x148] sm:$0xff]
        %v264 = vld [vmem:[%s2 + $0x150] sm:$0xff]
        %v265 = vld [vmem:[%s2 + $0x158] sm:$0xff]
        %v266 = vld [vmem:[%s2 + $0x160] sm:$0xff]
        %v267 = vld [vmem:[%s2 + $0x168] sm:$0xff]
        %v268 = vld [vmem:[%s2 + $0x170] sm:$0xff]
        %v269 = vld [vmem:[%s2 + $0x178] sm:$0xff]
        %v271 = vsel %vm197, %v221, 0
        %273 = vmatprep.subr.mxu0 0.0
        %274 = vmatpush1.msra.mxu0 %v222
        %275 = vmatprep.subr.mxu0 0.0
        %276 = vmatpush1.msra.mxu0 %v223
        %277 = vmatprep.subr.mxu0 0.0
        %278 = vmatpush1.msra.mxu0 %v224
        %279 = vmatprep.subr.mxu0 0.0
        %280 = vmatpush1.msra.mxu0 %v225
        %281 = vmatprep.subr.mxu0 0.0
        %282 = vmatpush1.msra.mxu0 0.0
        %283 = vmatprep.subr.mxu0 0.0
        %284 = vmatpush1.msra.mxu0 0.0
        %285 = vmatprep.subr.mxu0 0.0
        %286 = vmatpush1.msra.mxu0 0.0
        %287 = vmatprep.subr.mxu0 0.0
        %288 = vmatpush1.msra.mxu0 0.0
        %289 = vmatprep.subr.mxu0 0.0
        %290 = vmatpush1.msra.mxu0 0.0
        %291 = vmatprep.subr.mxu0 0.0
        %292 = vmatpush1.msra.mxu0 0.0
        %293 = vmatprep.subr.mxu0 0.0
        %294 = vmatpush1.msra.mxu0 0.0
        %295 = vmatprep.subr.mxu0 0.0
        %296 = vmatpush1.msra.mxu0 0.0
        %297 = vmatprep.subr.mxu0 0.0
        %298 = vmatpush1.msra.mxu0 0.0
        %299 = vmatprep.subr.mxu0 0.0
        %300 = vmatpush1.msra.mxu0 0.0
        %301 = vmatprep.subr.mxu0 0.0
        %302 = vmatpush1.msra.mxu0 0.0
        %303 = vmatprep.subr.mxu0 0.0
        %304 = vmatpush1.msra.mxu0 0.0
        %305 = vmatprep.subr.mxu0 0.0
        %306 = vmatpush1.msra.mxu0 0.0
        %307 = vmatprep.subr.mxu0 0.0
        %308 = vmatpush1.msra.mxu0 0.0
        %309 = vmatprep.subr.mxu0 0.0
        %310 = vmatpush1.msra.mxu0 0.0
        %311 = vmatprep.subr.mxu0 0.0
        %312 = vmatpush1.msra.mxu0 0.0
        %313 = vmatprep.subr.mxu0 0.0
        %314 = vmatpush1.msra.mxu0 0.0
        %315 = vmatprep.subr.mxu0 0.0
        %316 = vmatpush1.msra.mxu0 0.0
        %317 = vmatprep.subr.mxu0 0.0
        %318 = vmatpush1.msra.mxu0 0.0
        %319 = vmatprep.subr.mxu0 0.0
        %320 = vmatpush1.msra.mxu0 0.0
        %321 = vmatprep.subr.mxu0 0.0
        %322 = vmatpush1.msra.mxu0 0.0
        %323 = vmatprep.subr.mxu0 0.0
        %324 = vmatpush1.msra.mxu0 0.0
        %325 = vmatprep.subr.mxu0 0.0
        %326 = vmatpush1.msra.mxu0 0.0
        %327 = vmatprep.subr.mxu0 0.0
        %328 = vmatpush1.msra.mxu0 0.0
        %329 = vmatprep.subr.mxu0 0.0
        %330 = vmatpush1.msra.mxu0 0.0
        %331 = vmatprep.subr.mxu0 0.0
        %332 = vmatpush1.msra.mxu0 0.0
        %333 = vmatprep.subr.mxu0 0.0
        %334 = vmatpush1.msra.mxu0 0.0
        %335 = vmatprep.subr.mxu0 0.0
        %336 = vmatpush1.msra.mxu0 0.0
        %337 = vmatprep.mubr.f32.mxu0 0.0
        %338 = vmatmul.mubr.f32.gmra.mrb[0].mxu0 %v271
        %v339 = vpop.f32.mrb[0].mxu0
        %v340 = vadd.f32 0.0, %v339
        %v341 = vpop.f32.mrb[0].mxu0
        %342 = vdwg.mxu0
        %343 = vmatprep.subr.mxu0 0.0
        %344 = vmatpush1.msra.mxu0 %v226
        %345 = vmatprep.subr.mxu0 0.0
        %346 = vmatpush1.msra.mxu0 %v227
        %347 = vmatprep.subr.mxu0 0.0
        %348 = vmatpush1.msra.mxu0 %v228
        %349 = vmatprep.subr.mxu0 0.0
        %350 = vmatpush1.msra.mxu0 %v229
        %351 = vmatprep.subr.mxu0 0.0
        %352 = vmatpush1.msra.mxu0 0.0
        %353 = vmatprep.subr.mxu0 0.0
        %354 = vmatpush1.msra.mxu0 0.0
        %355 = vmatprep.subr.mxu0 0.0
        %356 = vmatpush1.msra.mxu0 0.0
        %357 = vmatprep.subr.mxu0 0.0
        %358 = vmatpush1.msra.mxu0 0.0
        %359 = vmatprep.subr.mxu0 0.0
        %360 = vmatpush1.msra.mxu0 0.0
        %361 = vmatprep.subr.mxu0 0.0
        %362 = vmatpush1.msra.mxu0 0.0
        %363 = vmatprep.subr.mxu0 0.0
        %364 = vmatpush1.msra.mxu0 0.0
        %365 = vmatprep.subr.mxu0 0.0
        %366 = vmatpush1.msra.mxu0 0.0
        %367 = vmatprep.subr.mxu0 0.0
        %368 = vmatpush1.msra.mxu0 0.0
        %369 = vmatprep.subr.mxu0 0.0
        %370 = vmatpush1.msra.mxu0 0.0
        %371 = vmatprep.subr.mxu0 0.0
        %372 = vmatpush1.msra.mxu0 0.0
        %373 = vmatprep.subr.mxu0 0.0
        %374 = vmatpush1.msra.mxu0 0.0
        %375 = vmatprep.subr.mxu0 0.0
        %376 = vmatpush1.msra.mxu0 0.0
        %377 = vmatprep.subr.mxu0 0.0
        %378 = vmatpush1.msra.mxu0 0.0
        %379 = vmatprep.subr.mxu0 0.0
        %380 = vmatpush1.msra.mxu0 0.0
        %381 = vmatprep.subr.mxu0 0.0
        %382 = vmatpush1.msra.mxu0 0.0
        %383 = vmatprep.subr.mxu0 0.0
        %384 = vmatpush1.msra.mxu0 0.0
        %385 = vmatprep.subr.mxu0 0.0
        %386 = vmatpush1.msra.mxu0 0.0
        %387 = vmatprep.subr.mxu0 0.0
        %388 = vmatpush1.msra.mxu0 0.0
        %389 = vmatprep.subr.mxu0 0.0
        %390 = vmatpush1.msra.mxu0 0.0
        %391 = vmatprep.subr.mxu0 0.0
        %392 = vmatpush1.msra.mxu0 0.0
        %393 = vmatprep.subr.mxu0 0.0
        %394 = vmatpush1.msra.mxu0 0.0
        %395 = vmatprep.subr.mxu0 0.0
        %396 = vmatpush1.msra.mxu0 0.0
        %397 = vmatprep.subr.mxu0 0.0
        %398 = vmatpush1.msra.mxu0 0.0
        %399 = vmatprep.subr.mxu0 0.0
        %400 = vmatpush1.msra.mxu0 0.0
        %401 = vmatprep.subr.mxu0 0.0
        %402 = vmatpush1.msra.mxu0 0.0
        %403 = vmatprep.subr.mxu0 0.0
        %404 = vmatpush1.msra.mxu0 0.0
        %405 = vmatprep.subr.mxu0 0.0
        %406 = vmatpush1.msra.mxu0 0.0
        %407 = vmatprep.mubr.f32.mxu0 0.0
        %408 = vmatmul.mubr.f32.gmra.mrb[0].mxu0 %v271
        %v409 = vpop.f32.mrb[0].mxu0
        %v410 = vadd.f32 0.0, %v409
        %v411 = vpop.f32.mrb[0].mxu0
        %412 = vdwg.mxu0
        %413 = vmatprep.subr.mxu0 0.0
        %414 = vmatpush1.msra.mxu0 %v230
        %415 = vmatprep.subr.mxu0 0.0
        %416 = vmatpush1.msra.mxu0 %v231
        %417 = vmatprep.subr.mxu0 0.0
        %418 = vmatpush1.msra.mxu0 %v232
        %419 = vmatprep.subr.mxu0 0.0
        %420 = vmatpush1.msra.mxu0 %v233
        %421 = vmatprep.subr.mxu0 0.0
        %422 = vmatpush1.msra.mxu0 0.0
        %423 = vmatprep.subr.mxu0 0.0
        %424 = vmatpush1.msra.mxu0 0.0
        %425 = vmatprep.subr.mxu0 0.0
        %426 = vmatpush1.msra.mxu0 0.0
        %427 = vmatprep.subr.mxu0 0.0
        %428 = vmatpush1.msra.mxu0 0.0
        %429 = vmatprep.subr.mxu0 0.0
        %430 = vmatpush1.msra.mxu0 0.0
        %431 = vmatprep.subr.mxu0 0.0
        %432 = vmatpush1.msra.mxu0 0.0
        %433 = vmatprep.subr.mxu0 0.0
        %434 = vmatpush1.msra.mxu0 0.0
        %435 = vmatprep.subr.mxu0 0.0
        %436 = vmatpush1.msra.mxu0 0.0
        %437 = vmatprep.subr.mxu0 0.0
        %438 = vmatpush1.msra.mxu0 0.0
        %439 = vmatprep.subr.mxu0 0.0
        %440 = vmatpush1.msra.mxu0 0.0
        %441 = vmatprep.subr.mxu0 0.0
        %442 = vmatpush1.msra.mxu0 0.0
        %443 = vmatprep.subr.mxu0 0.0
        %444 = vmatpush1.msra.mxu0 0.0
        %445 = vmatprep.subr.mxu0 0.0
        %446 = vmatpush1.msra.mxu0 0.0
        %447 = vmatprep.subr.mxu0 0.0
        %448 = vmatpush1.msra.mxu0 0.0
        %449 = vmatprep.subr.mxu0 0.0
        %450 = vmatpush1.msra.mxu0 0.0
        %451 = vmatprep.subr.mxu0 0.0
        %452 = vmatpush1.msra.mxu0 0.0
        %453 = vmatprep.subr.mxu0 0.0
        %454 = vmatpush1.msra.mxu0 0.0
        %455 = vmatprep.subr.mxu0 0.0
        %456 = vmatpush1.msra.mxu0 0.0
        %457 = vmatprep.subr.mxu0 0.0
        %458 = vmatpush1.msra.mxu0 0.0
        %459 = vmatprep.subr.mxu0 0.0
        %460 = vmatpush1.msra.mxu0 0.0
        %461 = vmatprep.subr.mxu0 0.0
        %462 = vmatpush1.msra.mxu0 0.0
        %463 = vmatprep.subr.mxu0 0.0
        %464 = vmatpush1.msra.mxu0 0.0
        %465 = vmatprep.subr.mxu0 0.0
        %466 = vmatpush1.msra.mxu0 0.0
        %467 = vmatprep.subr.mxu0 0.0
        %468 = vmatpush1.msra.mxu0 0.0
        %469 = vmatprep.subr.mxu0 0.0
        %470 = vmatpush1.msra.mxu0 0.0
        %471 = vmatprep.subr.mxu0 0.0
        %472 = vmatpush1.msra.mxu0 0.0
        %473 = vmatprep.subr.mxu0 0.0
        %474 = vmatpush1.msra.mxu0 0.0
        %475 = vmatprep.subr.mxu0 0.0
        %476 = vmatpush1.msra.mxu0 0.0
        %477 = vmatprep.mubr.f32.mxu0 0.0
        %478 = vmatmul.mubr.f32.gmra.mrb[0].mxu0 %v271
        %v479 = vpop.f32.mrb[0].mxu0
        %v480 = vadd.f32 0.0, %v479
        %v481 = vpop.f32.mrb[0].mxu0
        %482 = vdwg.mxu0
        %483 = vmatprep.subr.mxu0 0.0
        %484 = vmatpush1.msra.mxu0 %v234
        %485 = vmatprep.subr.mxu0 0.0
        %486 = vmatpush1.msra.mxu0 %v235
        %487 = vmatprep.subr.mxu0 0.0
        %488 = vmatpush1.msra.mxu0 %v236
        %489 = vmatprep.subr.mxu0 0.0
        %490 = vmatpush1.msra.mxu0 %v237
        %491 = vmatprep.subr.mxu0 0.0
        %492 = vmatpush1.msra.mxu0 0.0
        %493 = vmatprep.subr.mxu0 0.0
        %494 = vmatpush1.msra.mxu0 0.0
        %495 = vmatprep.subr.mxu0 0.0
        %496 = vmatpush1.msra.mxu0 0.0
        %497 = vmatprep.subr.mxu0 0.0
        %498 = vmatpush1.msra.mxu0 0.0
        %499 = vmatprep.subr.mxu0 0.0
        %500 = vmatpush1.msra.mxu0 0.0
        %501 = vmatprep.subr.mxu0 0.0
        %502 = vmatpush1.msra.mxu0 0.0
        %503 = vmatprep.subr.mxu0 0.0
        %504 = vmatpush1.msra.mxu0 0.0
        %505 = vmatprep.subr.mxu0 0.0
        %506 = vmatpush1.msra.mxu0 0.0
        %507 = vmatprep.subr.mxu0 0.0
        %508 = vmatpush1.msra.mxu0 0.0
        %509 = vmatprep.subr.mxu0 0.0
        %510 = vmatpush1.msra.mxu0 0.0
        %511 = vmatprep.subr.mxu0 0.0
        %512 = vmatpush1.msra.mxu0 0.0
        %513 = vmatprep.subr.mxu0 0.0
        %514 = vmatpush1.msra.mxu0 0.0
        %515 = vmatprep.subr.mxu0 0.0
        %516 = vmatpush1.msra.mxu0 0.0
        %517 = vmatprep.subr.mxu0 0.0
        %518 = vmatpush1.msra.mxu0 0.0
        %519 = vmatprep.subr.mxu0 0.0
        %520 = vmatpush1.msra.mxu0 0.0
        %521 = vmatprep.subr.mxu0 0.0
        %522 = vmatpush1.msra.mxu0 0.0
        %523 = vmatprep.subr.mxu0 0.0
        %524 = vmatpush1.msra.mxu0 0.0
        %525 = vmatprep.subr.mxu0 0.0
        %526 = vmatpush1.msra.mxu0 0.0
        %527 = vmatprep.subr.mxu0 0.0
        %528 = vmatpush1.msra.mxu0 0.0
        %529 = vmatprep.subr.mxu0 0.0
        %530 = vmatpush1.msra.mxu0 0.0
        %531 = vmatprep.subr.mxu0 0.0
        %532 = vmatpush1.msra.mxu0 0.0
        %533 = vmatprep.subr.mxu0 0.0
        %534 = vmatpush1.msra.mxu0 0.0
        %535 = vmatprep.subr.mxu0 0.0
        %536 = vmatpush1.msra.mxu0 0.0
        %537 = vmatprep.subr.mxu0 0.0
        %538 = vmatpush1.msra.mxu0 0.0
        %539 = vmatprep.subr.mxu0 0.0
        %540 = vmatpush1.msra.mxu0 0.0
        %541 = vmatprep.subr.mxu0 0.0
        %542 = vmatpush1.msra.mxu0 0.0
        %543 = vmatprep.subr.mxu0 0.0
        %544 = vmatpush1.msra.mxu0 0.0
        %545 = vmatprep.subr.mxu0 0.0
        %546 = vmatpush1.msra.mxu0 0.0
        %547 = vmatprep.mubr.f32.mxu0 0.0
        %548 = vmatmul.mubr.f32.gmra.mrb[0].mxu0 %v271
        %v549 = vpop.f32.mrb[0].mxu0
        %v550 = vadd.f32 0.0, %v549
        %v551 = vpop.f32.mrb[0].mxu0
        %552 = vdwg.mxu0
        %553 = vmatprep.subr.mxu0 0.0
        %554 = vmatpush1.msra.mxu0 %v238
        %555 = vmatprep.subr.mxu0 0.0
        %556 = vmatpush1.msra.mxu0 %v239
        %557 = vmatprep.subr.mxu0 0.0
        %558 = vmatpush1.msra.mxu0 %v240
        %559 = vmatprep.subr.mxu0 0.0
        %560 = vmatpush1.msra.mxu0 %v241
        %561 = vmatprep.subr.mxu0 0.0
        %562 = vmatpush1.msra.mxu0 0.0
        %563 = vmatprep.subr.mxu0 0.0
        %564 = vmatpush1.msra.mxu0 0.0
        %565 = vmatprep.subr.mxu0 0.0
        %566 = vmatpush1.msra.mxu0 0.0
        %567 = vmatprep.subr.mxu0 0.0
        %568 = vmatpush1.msra.mxu0 0.0
        %569 = vmatprep.subr.mxu0 0.0
        %570 = vmatpush1.msra.mxu0 0.0
        %571 = vmatprep.subr.mxu0 0.0
        %572 = vmatpush1.msra.mxu0 0.0
        %573 = vmatprep.subr.mxu0 0.0
        %574 = vmatpush1.msra.mxu0 0.0
        %575 = vmatprep.subr.mxu0 0.0
        %576 = vmatpush1.msra.mxu0 0.0
        %577 = vmatprep.subr.mxu0 0.0
        %578 = vmatpush1.msra.mxu0 0.0
        %579 = vmatprep.subr.mxu0 0.0
        %580 = vmatpush1.msra.mxu0 0.0
        %581 = vmatprep.subr.mxu0 0.0
        %582 = vmatpush1.msra.mxu0 0.0
        %583 = vmatprep.subr.mxu0 0.0
        %584 = vmatpush1.msra.mxu0 0.0
        %585 = vmatprep.subr.mxu0 0.0
        %586 = vmatpush1.msra.mxu0 0.0
        %587 = vmatprep.subr.mxu0 0.0
        %588 = vmatpush1.msra.mxu0 0.0
        %589 = vmatprep.subr.mxu0 0.0
        %590 = vmatpush1.msra.mxu0 0.0
        %591 = vmatprep.subr.mxu0 0.0
        %592 = vmatpush1.msra.mxu0 0.0
        %593 = vmatprep.subr.mxu0 0.0
        %594 = vmatpush1.msra.mxu0 0.0
        %595 = vmatprep.subr.mxu0 0.0
        %596 = vmatpush1.msra.mxu0 0.0
        %597 = vmatprep.subr.mxu0 0.0
        %598 = vmatpush1.msra.mxu0 0.0
        %599 = vmatprep.subr.mxu0 0.0
        %600 = vmatpush1.msra.mxu0 0.0
        %601 = vmatprep.subr.mxu0 0.0
        %602 = vmatpush1.msra.mxu0 0.0
        %603 = vmatprep.subr.mxu0 0.0
        %604 = vmatpush1.msra.mxu0 0.0
        %605 = vmatprep.subr.mxu0 0.0
        %606 = vmatpush1.msra.mxu0 0.0
        %607 = vmatprep.subr.mxu0 0.0
        %608 = vmatpush1.msra.mxu0 0.0
        %609 = vmatprep.subr.mxu0 0.0
        %610 = vmatpush1.msra.mxu0 0.0
        %611 = vmatprep.subr.mxu0 0.0
        %612 = vmatpush1.msra.mxu0 0.0
        %613 = vmatprep.subr.mxu0 0.0
        %614 = vmatpush1.msra.mxu0 0.0
        %615 = vmatprep.subr.mxu0 0.0
        %616 = vmatpush1.msra.mxu0 0.0
        %617 = vmatprep.mubr.f32.mxu0 0.0
        %618 = vmatmul.mubr.f32.gmra.mrb[0].mxu0 %v271
        %v619 = vpop.f32.mrb[0].mxu0
        %v620 = vadd.f32 0.0, %v619
        %v621 = vpop.f32.mrb[0].mxu0
        %622 = vdwg.mxu0
        %623 = vmatprep.subr.mxu0 0.0
        %624 = vmatpush1.msra.mxu0 %v242
        %625 = vmatprep.subr.mxu0 0.0
        %626 = vmatpush1.msra.mxu0 %v243
        %627 = vmatprep.subr.mxu0 0.0
        %628 = vmatpush1.msra.mxu0 %v244
        %629 = vmatprep.subr.mxu0 0.0
        %630 = vmatpush1.msra.mxu0 %v245
        %631 = vmatprep.subr.mxu0 0.0
        %632 = vmatpush1.msra.mxu0 0.0
        %633 = vmatprep.subr.mxu0 0.0
        %634 = vmatpush1.msra.mxu0 0.0
        %635 = vmatprep.subr.mxu0 0.0
        %636 = vmatpush1.msra.mxu0 0.0
        %637 = vmatprep.subr.mxu0 0.0
        %638 = vmatpush1.msra.mxu0 0.0
        %639 = vmatprep.subr.mxu0 0.0
        %640 = vmatpush1.msra.mxu0 0.0
        %641 = vmatprep.subr.mxu0 0.0
        %642 = vmatpush1.msra.mxu0 0.0
        %643 = vmatprep.subr.mxu0 0.0
        %644 = vmatpush1.msra.mxu0 0.0
        %645 = vmatprep.subr.mxu0 0.0
        %646 = vmatpush1.msra.mxu0 0.0
        %647 = vmatprep.subr.mxu0 0.0
        %648 = vmatpush1.msra.mxu0 0.0
        %649 = vmatprep.subr.mxu0 0.0
        %650 = vmatpush1.msra.mxu0 0.0
        %651 = vmatprep.subr.mxu0 0.0
        %652 = vmatpush1.msra.mxu0 0.0
        %653 = vmatprep.subr.mxu0 0.0
        %654 = vmatpush1.msra.mxu0 0.0
        %655 = vmatprep.subr.mxu0 0.0
        %656 = vmatpush1.msra.mxu0 0.0
        %657 = vmatprep.subr.mxu0 0.0
        %658 = vmatpush1.msra.mxu0 0.0
        %659 = vmatprep.subr.mxu0 0.0
        %660 = vmatpush1.msra.mxu0 0.0
        %661 = vmatprep.subr.mxu0 0.0
        %662 = vmatpush1.msra.mxu0 0.0
        %663 = vmatprep.subr.mxu0 0.0
        %664 = vmatpush1.msra.mxu0 0.0
        %665 = vmatprep.subr.mxu0 0.0
        %666 = vmatpush1.msra.mxu0 0.0
        %667 = vmatprep.subr.mxu0 0.0
        %668 = vmatpush1.msra.mxu0 0.0
        %669 = vmatprep.subr.mxu0 0.0
        %670 = vmatpush1.msra.mxu0 0.0
        %671 = vmatprep.subr.mxu0 0.0
        %672 = vmatpush1.msra.mxu0 0.0
        %673 = vmatprep.subr.mxu0 0.0
        %674 = vmatpush1.msra.mxu0 0.0
        %675 = vmatprep.subr.mxu0 0.0
        %676 = vmatpush1.msra.mxu0 0.0
        %677 = vmatprep.subr.mxu0 0.0
        %678 = vmatpush1.msra.mxu0 0.0
        %679 = vmatprep.subr.mxu0 0.0
        %680 = vmatpush1.msra.mxu0 0.0
        %681 = vmatprep.subr.mxu0 0.0
        %682 = vmatpush1.msra.mxu0 0.0
        %683 = vmatprep.subr.mxu0 0.0
        %684 = vmatpush1.msra.mxu0 0.0
        %685 = vmatprep.subr.mxu0 0.0
        %686 = vmatpush1.msra.mxu0 0.0
        %687 = vmatprep.mubr.f32.mxu0 0.0
        %688 = vmatmul.mubr.f32.gmra.mrb[0].mxu0 %v271
        %v689 = vpop.f32.mrb[0].mxu0
        %v690 = vadd.f32 0.0, %v689
        %v691 = vpop.f32.mrb[0].mxu0
        %692 = vdwg.mxu0
        %693 = vmatprep.subr.mxu0 0.0
        %694 = vmatpush1.msra.mxu0 %v246
        %695 = vmatprep.subr.mxu0 0.0
        %696 = vmatpush1.msra.mxu0 %v247
        %697 = vmatprep.subr.mxu0 0.0
        %698 = vmatpush1.msra.mxu0 %v248
        %699 = vmatprep.subr.mxu0 0.0
        %700 = vmatpush1.msra.mxu0 %v249
        %701 = vmatprep.subr.mxu0 0.0
        %702 = vmatpush1.msra.mxu0 0.0
        %703 = vmatprep.subr.mxu0 0.0
        %704 = vmatpush1.msra.mxu0 0.0
        %705 = vmatprep.subr.mxu0 0.0
        %706 = vmatpush1.msra.mxu0 0.0
        %707 = vmatprep.subr.mxu0 0.0
        %708 = vmatpush1.msra.mxu0 0.0
        %709 = vmatprep.subr.mxu0 0.0
        %710 = vmatpush1.msra.mxu0 0.0
        %711 = vmatprep.subr.mxu0 0.0
        %712 = vmatpush1.msra.mxu0 0.0
        %713 = vmatprep.subr.mxu0 0.0
        %714 = vmatpush1.msra.mxu0 0.0
        %715 = vmatprep.subr.mxu0 0.0
        %716 = vmatpush1.msra.mxu0 0.0
        %717 = vmatprep.subr.mxu0 0.0
        %718 = vmatpush1.msra.mxu0 0.0
        %719 = vmatprep.subr.mxu0 0.0
        %720 = vmatpush1.msra.mxu0 0.0
        %721 = vmatprep.subr.mxu0 0.0
        %722 = vmatpush1.msra.mxu0 0.0
        %723 = vmatprep.subr.mxu0 0.0
        %724 = vmatpush1.msra.mxu0 0.0
        %725 = vmatprep.subr.mxu0 0.0
        %726 = vmatpush1.msra.mxu0 0.0
        %727 = vmatprep.subr.mxu0 0.0
        %728 = vmatpush1.msra.mxu0 0.0
        %729 = vmatprep.subr.mxu0 0.0
        %730 = vmatpush1.msra.mxu0 0.0
        %731 = vmatprep.subr.mxu0 0.0
        %732 = vmatpush1.msra.mxu0 0.0
        %733 = vmatprep.subr.mxu0 0.0
        %734 = vmatpush1.msra.mxu0 0.0
        %735 = vmatprep.subr.mxu0 0.0
        %736 = vmatpush1.msra.mxu0 0.0
        %737 = vmatprep.subr.mxu0 0.0
        %738 = vmatpush1.msra.mxu0 0.0
        %739 = vmatprep.subr.mxu0 0.0
        %740 = vmatpush1.msra.mxu0 0.0
        %741 = vmatprep.subr.mxu0 0.0
        %742 = vmatpush1.msra.mxu0 0.0
        %743 = vmatprep.subr.mxu0 0.0
        %744 = vmatpush1.msra.mxu0 0.0
        %745 = vmatprep.subr.mxu0 0.0
        %746 = vmatpush1.msra.mxu0 0.0
        %747 = vmatprep.subr.mxu0 0.0
        %748 = vmatpush1.msra.mxu0 0.0
        %749 = vmatprep.subr.mxu0 0.0
        %750 = vmatpush1.msra.mxu0 0.0
        %751 = vmatprep.subr.mxu0 0.0
        %752 = vmatpush1.msra.mxu0 0.0
        %753 = vmatprep.subr.mxu0 0.0
        %754 = vmatpush1.msra.mxu0 0.0
        %755 = vmatprep.subr.mxu0 0.0
        %756 = vmatpush1.msra.mxu0 0.0
        %757 = vmatprep.mubr.f32.mxu0 0.0
        %758 = vmatmul.mubr.f32.gmra.mrb[0].mxu0 %v271
        %v759 = vpop.f32.mrb[0].mxu0
        %v760 = vadd.f32 0.0, %v759
        %v761 = vpop.f32.mrb[0].mxu0
        %762 = vdwg.mxu0
        %763 = vmatprep.subr.mxu0 0.0
        %764 = vmatpush1.msra.mxu0 %v250
        %765 = vmatprep.subr.mxu0 0.0
        %766 = vmatpush1.msra.mxu0 %v251
        %767 = vmatprep.subr.mxu0 0.0
        %768 = vmatpush1.msra.mxu0 %v252
        %769 = vmatprep.subr.mxu0 0.0
        %770 = vmatpush1.msra.mxu0 %v253
        %771 = vmatprep.subr.mxu0 0.0
        %772 = vmatpush1.msra.mxu0 0.0
        %773 = vmatprep.subr.mxu0 0.0
        %774 = vmatpush1.msra.mxu0 0.0
        %775 = vmatprep.subr.mxu0 0.0
        %776 = vmatpush1.msra.mxu0 0.0
        %777 = vmatprep.subr.mxu0 0.0
        %778 = vmatpush1.msra.mxu0 0.0
        %779 = vmatprep.subr.mxu0 0.0
        %780 = vmatpush1.msra.mxu0 0.0
        %781 = vmatprep.subr.mxu0 0.0
        %782 = vmatpush1.msra.mxu0 0.0
        %783 = vmatprep.subr.mxu0 0.0
        %784 = vmatpush1.msra.mxu0 0.0
        %785 = vmatprep.subr.mxu0 0.0
        %786 = vmatpush1.msra.mxu0 0.0
        %787 = vmatprep.subr.mxu0 0.0
        %788 = vmatpush1.msra.mxu0 0.0
        %789 = vmatprep.subr.mxu0 0.0
        %790 = vmatpush1.msra.mxu0 0.0
        %791 = vmatprep.subr.mxu0 0.0
        %792 = vmatpush1.msra.mxu0 0.0
        %793 = vmatprep.subr.mxu0 0.0
        %794 = vmatpush1.msra.mxu0 0.0
        %795 = vmatprep.subr.mxu0 0.0
        %796 = vmatpush1.msra.mxu0 0.0
        %797 = vmatprep.subr.mxu0 0.0
        %798 = vmatpush1.msra.mxu0 0.0
        %799 = vmatprep.subr.mxu0 0.0
        %800 = vmatpush1.msra.mxu0 0.0
        %801 = vmatprep.subr.mxu0 0.0
        %802 = vmatpush1.msra.mxu0 0.0
        %803 = vmatprep.subr.mxu0 0.0
        %804 = vmatpush1.msra.mxu0 0.0
        %805 = vmatprep.subr.mxu0 0.0
        %806 = vmatpush1.msra.mxu0 0.0
        %807 = vmatprep.subr.mxu0 0.0
        %808 = vmatpush1.msra.mxu0 0.0
        %809 = vmatprep.subr.mxu0 0.0
        %810 = vmatpush1.msra.mxu0 0.0
        %811 = vmatprep.subr.mxu0 0.0
        %812 = vmatpush1.msra.mxu0 0.0
        %813 = vmatprep.subr.mxu0 0.0
        %814 = vmatpush1.msra.mxu0 0.0
        %815 = vmatprep.subr.mxu0 0.0
        %816 = vmatpush1.msra.mxu0 0.0
        %817 = vmatprep.subr.mxu0 0.0
        %818 = vmatpush1.msra.mxu0 0.0
        %819 = vmatprep.subr.mxu0 0.0
        %820 = vmatpush1.msra.mxu0 0.0
        %821 = vmatprep.subr.mxu0 0.0
        %822 = vmatpush1.msra.mxu0 0.0
        %823 = vmatprep.subr.mxu0 0.0
        %824 = vmatpush1.msra.mxu0 0.0
        %825 = vmatprep.subr.mxu0 0.0
        %826 = vmatpush1.msra.mxu0 0.0
        %827 = vmatprep.mubr.f32.mxu0 0.0
        %828 = vmatmul.mubr.f32.gmra.mrb[0].mxu0 %v271
        %v829 = vpop.f32.mrb[0].mxu0
        %v830 = vadd.f32 0.0, %v829
        %v831 = vpop.f32.mrb[0].mxu0
        %832 = vdwg.mxu0
        %833 = vmatprep.subr.mxu0 0.0
        %834 = vmatpush1.msra.mxu0 %v254
        %835 = vmatprep.subr.mxu0 0.0
        %836 = vmatpush1.msra.mxu0 %v255
        %837 = vmatprep.subr.mxu0 0.0
        %838 = vmatpush1.msra.mxu0 %v256
        %839 = vmatprep.subr.mxu0 0.0
        %840 = vmatpush1.msra.mxu0 %v257
        %841 = vmatprep.subr.mxu0 0.0
        %842 = vmatpush1.msra.mxu0 0.0
        %843 = vmatprep.subr.mxu0 0.0
        %844 = vmatpush1.msra.mxu0 0.0
        %845 = vmatprep.subr.mxu0 0.0
        %846 = vmatpush1.msra.mxu0 0.0
        %847 = vmatprep.subr.mxu0 0.0
        %848 = vmatpush1.msra.mxu0 0.0
        %849 = vmatprep.subr.mxu0 0.0
        %850 = vmatpush1.msra.mxu0 0.0
        %851 = vmatprep.subr.mxu0 0.0
        %852 = vmatpush1.msra.mxu0 0.0
        %853 = vmatprep.subr.mxu0 0.0
        %854 = vmatpush1.msra.mxu0 0.0
        %855 = vmatprep.subr.mxu0 0.0
        %856 = vmatpush1.msra.mxu0 0.0
        %857 = vmatprep.subr.mxu0 0.0
        %858 = vmatpush1.msra.mxu0 0.0
        %859 = vmatprep.subr.mxu0 0.0
        %860 = vmatpush1.msra.mxu0 0.0
        %861 = vmatprep.subr.mxu0 0.0
        %862 = vmatpush1.msra.mxu0 0.0
        %863 = vmatprep.subr.mxu0 0.0
        %864 = vmatpush1.msra.mxu0 0.0
        %865 = vmatprep.subr.mxu0 0.0
        %866 = vmatpush1.msra.mxu0 0.0
        %867 = vmatprep.subr.mxu0 0.0
        %868 = vmatpush1.msra.mxu0 0.0
        %869 = vmatprep.subr.mxu0 0.0
        %870 = vmatpush1.msra.mxu0 0.0
        %871 = vmatprep.subr.mxu0 0.0
        %872 = vmatpush1.msra.mxu0 0.0
        %873 = vmatprep.subr.mxu0 0.0
        %874 = vmatpush1.msra.mxu0 0.0
        %875 = vmatprep.subr.mxu0 0.0
        %876 = vmatpush1.msra.mxu0 0.0
        %877 = vmatprep.subr.mxu0 0.0
        %878 = vmatpush1.msra.mxu0 0.0
        %879 = vmatprep.subr.mxu0 0.0
        %880 = vmatpush1.msra.mxu0 0.0
        %881 = vmatprep.subr.mxu0 0.0
        %882 = vmatpush1.msra.mxu0 0.0
        %883 = vmatprep.subr.mxu0 0.0
        %884 = vmatpush1.msra.mxu0 0.0
        %885 = vmatprep.subr.mxu0 0.0
        %886 = vmatpush1.msra.mxu0 0.0
        %887 = vmatprep.subr.mxu0 0.0
        %888 = vmatpush1.msra.mxu0 0.0
        %889 = vmatprep.subr.mxu0 0.0
        %890 = vmatpush1.msra.mxu0 0.0
        %891 = vmatprep.subr.mxu0 0.0
        %892 = vmatpush1.msra.mxu0 0.0
        %893 = vmatprep.subr.mxu0 0.0
        %894 = vmatpush1.msra.mxu0 0.0
        %895 = vmatprep.subr.mxu0 0.0
        %896 = vmatpush1.msra.mxu0 0.0
        %897 = vmatprep.mubr.f32.mxu0 0.0
        %898 = vmatmul.mubr.f32.gmra.mrb[0].mxu0 %v271
        %v899 = vpop.f32.mrb[0].mxu0
        %v900 = vadd.f32 0.0, %v899
        %v901 = vpop.f32.mrb[0].mxu0
        %902 = vdwg.mxu0
        %903 = vmatprep.subr.mxu0 0.0
        %904 = vmatpush1.msra.mxu0 %v258
        %905 = vmatprep.subr.mxu0 0.0
        %906 = vmatpush1.msra.mxu0 %v259
        %907 = vmatprep.subr.mxu0 0.0
        %908 = vmatpush1.msra.mxu0 %v260
        %909 = vmatprep.subr.mxu0 0.0
        %910 = vmatpush1.msra.mxu0 %v261
        %911 = vmatprep.subr.mxu0 0.0
        %912 = vmatpush1.msra.mxu0 0.0
        %913 = vmatprep.subr.mxu0 0.0
        %914 = vmatpush1.msra.mxu0 0.0
        %915 = vmatprep.subr.mxu0 0.0
        %916 = vmatpush1.msra.mxu0 0.0
        %917 = vmatprep.subr.mxu0 0.0
        %918 = vmatpush1.msra.mxu0 0.0
        %919 = vmatprep.subr.mxu0 0.0
        %920 = vmatpush1.msra.mxu0 0.0
        %921 = vmatprep.subr.mxu0 0.0
        %922 = vmatpush1.msra.mxu0 0.0
        %923 = vmatprep.subr.mxu0 0.0
        %924 = vmatpush1.msra.mxu0 0.0
        %925 = vmatprep.subr.mxu0 0.0
        %926 = vmatpush1.msra.mxu0 0.0
        %927 = vmatprep.subr.mxu0 0.0
        %928 = vmatpush1.msra.mxu0 0.0
        %929 = vmatprep.subr.mxu0 0.0
        %930 = vmatpush1.msra.mxu0 0.0
        %931 = vmatprep.subr.mxu0 0.0
        %932 = vmatpush1.msra.mxu0 0.0
        %933 = vmatprep.subr.mxu0 0.0
        %934 = vmatpush1.msra.mxu0 0.0
        %935 = vmatprep.subr.mxu0 0.0
        %936 = vmatpush1.msra.mxu0 0.0
        %937 = vmatprep.subr.mxu0 0.0
        %938 = vmatpush1.msra.mxu0 0.0
        %939 = vmatprep.subr.mxu0 0.0
        %940 = vmatpush1.msra.mxu0 0.0
        %941 = vmatprep.subr.mxu0 0.0
        %942 = vmatpush1.msra.mxu0 0.0
        %943 = vmatprep.subr.mxu0 0.0
        %944 = vmatpush1.msra.mxu0 0.0
        %945 = vmatprep.subr.mxu0 0.0
        %946 = vmatpush1.msra.mxu0 0.0
        %947 = vmatprep.subr.mxu0 0.0
        %948 = vmatpush1.msra.mxu0 0.0
        %949 = vmatprep.subr.mxu0 0.0
        %950 = vmatpush1.msra.mxu0 0.0
        %951 = vmatprep.subr.mxu0 0.0
        %952 = vmatpush1.msra.mxu0 0.0
        %953 = vmatprep.subr.mxu0 0.0
        %954 = vmatpush1.msra.mxu0 0.0
        %955 = vmatprep.subr.mxu0 0.0
        %956 = vmatpush1.msra.mxu0 0.0
        %957 = vmatprep.subr.mxu0 0.0
        %958 = vmatpush1.msra.mxu0 0.0
        %959 = vmatprep.subr.mxu0 0.0
        %960 = vmatpush1.msra.mxu0 0.0
        %961 = vmatprep.subr.mxu0 0.0
        %962 = vmatpush1.msra.mxu0 0.0
        %963 = vmatprep.subr.mxu0 0.0
        %964 = vmatpush1.msra.mxu0 0.0
        %965 = vmatprep.subr.mxu0 0.0
        %966 = vmatpush1.msra.mxu0 0.0
        %967 = vmatprep.mubr.f32.mxu0 0.0
        %968 = vmatmul.mubr.f32.gmra.mrb[0].mxu0 %v271
        %v969 = vpop.f32.mrb[0].mxu0
        %v970 = vadd.f32 0.0, %v969
        %v971 = vpop.f32.mrb[0].mxu0
        %972 = vdwg.mxu0
        %973 = vmatprep.subr.mxu0 0.0
        %974 = vmatpush1.msra.mxu0 %v262
        %975 = vmatprep.subr.mxu0 0.0
        %976 = vmatpush1.msra.mxu0 %v263
        %977 = vmatprep.subr.mxu0 0.0
        %978 = vmatpush1.msra.mxu0 %v264
        %979 = vmatprep.subr.mxu0 0.0
        %980 = vmatpush1.msra.mxu0 %v265
        %981 = vmatprep.subr.mxu0 0.0
        %982 = vmatpush1.msra.mxu0 0.0
        %983 = vmatprep.subr.mxu0 0.0
        %984 = vmatpush1.msra.mxu0 0.0
        %985 = vmatprep.subr.mxu0 0.0
        %986 = vmatpush1.msra.mxu0 0.0
        %987 = vmatprep.subr.mxu0 0.0
        %988 = vmatpush1.msra.mxu0 0.0
        %989 = vmatprep.subr.mxu0 0.0
        %990 = vmatpush1.msra.mxu0 0.0
        %991 = vmatprep.subr.mxu0 0.0
        %992 = vmatpush1.msra.mxu0 0.0
        %993 = vmatprep.subr.mxu0 0.0
        %994 = vmatpush1.msra.mxu0 0.0
        %995 = vmatprep.subr.mxu0 0.0
        %996 = vmatpush1.msra.mxu0 0.0
        %997 = vmatprep.subr.mxu0 0.0
        %998 = vmatpush1.msra.mxu0 0.0
        %999 = vmatprep.subr.mxu0 0.0
        %1000 = vmatpush1.msra.mxu0 0.0
        %1001 = vmatprep.subr.mxu0 0.0
        %1002 = vmatpush1.msra.mxu0 0.0
        %1003 = vmatprep.subr.mxu0 0.0
        %1004 = vmatpush1.msra.mxu0 0.0
        %1005 = vmatprep.subr.mxu0 0.0
        %1006 = vmatpush1.msra.mxu0 0.0
        %1007 = vmatprep.subr.mxu0 0.0
        %1008 = vmatpush1.msra.mxu0 0.0
        %1009 = vmatprep.subr.mxu0 0.0
        %1010 = vmatpush1.msra.mxu0 0.0
        %1011 = vmatprep.subr.mxu0 0.0
        %1012 = vmatpush1.msra.mxu0 0.0
        %1013 = vmatprep.subr.mxu0 0.0
        %1014 = vmatpush1.msra.mxu0 0.0
        %1015 = vmatprep.subr.mxu0 0.0
        %1016 = vmatpush1.msra.mxu0 0.0
        %1017 = vmatprep.subr.mxu0 0.0
        %1018 = vmatpush1.msra.mxu0 0.0
        %1019 = vmatprep.subr.mxu0 0.0
        %1020 = vmatpush1.msra.mxu0 0.0
        %1021 = vmatprep.subr.mxu0 0.0
        %1022 = vmatpush1.msra.mxu0 0.0
        %1023 = vmatprep.subr.mxu0 0.0
        %1024 = vmatpush1.msra.mxu0 0.0
        %1025 = vmatprep.subr.mxu0 0.0
        %1026 = vmatpush1.msra.mxu0 0.0
        %1027 = vmatprep.subr.mxu0 0.0
        %1028 = vmatpush1.msra.mxu0 0.0
        %1029 = vmatprep.subr.mxu0 0.0
        %1030 = vmatpush1.msra.mxu0 0.0
        %1031 = vmatprep.subr.mxu0 0.0
        %1032 = vmatpush1.msra.mxu0 0.0
        %1033 = vmatprep.subr.mxu0 0.0
        %1034 = vmatpush1.msra.mxu0 0.0
        %1035 = vmatprep.subr.mxu0 0.0
        %1036 = vmatpush1.msra.mxu0 0.0
        %1037 = vmatprep.mubr.f32.mxu0 0.0
        %1038 = vmatmul.mubr.f32.gmra.mrb[0].mxu0 %v271
        %v1039 = vpop.f32.mrb[0].mxu0
        %v1040 = vadd.f32 0.0, %v1039
        %v1041 = vpop.f32.mrb[0].mxu0
        %1042 = vdwg.mxu0
        %1043 = vmatprep.subr.mxu0 0.0
        %1044 = vmatpush1.msra.mxu0 %v266
        %1045 = vmatprep.subr.mxu0 0.0
        %1046 = vmatpush1.msra.mxu0 %v267
        %1047 = vmatprep.subr.mxu0 0.0
        %1048 = vmatpush1.msra.mxu0 %v268
        %1049 = vmatprep.subr.mxu0 0.0
        %1050 = vmatpush1.msra.mxu0 %v269
        %1051 = vmatprep.subr.mxu0 0.0
        %1052 = vmatpush1.msra.mxu0 0.0
        %1053 = vmatprep.subr.mxu0 0.0
        %1054 = vmatpush1.msra.mxu0 0.0
        %1055 = vmatprep.subr.mxu0 0.0
        %1056 = vmatpush1.msra.mxu0 0.0
        %1057 = vmatprep.subr.mxu0 0.0
        %1058 = vmatpush1.msra.mxu0 0.0
        %1059 = vmatprep.subr.mxu0 0.0
        %1060 = vmatpush1.msra.mxu0 0.0
        %1061 = vmatprep.subr.mxu0 0.0
        %1062 = vmatpush1.msra.mxu0 0.0
        %1063 = vmatprep.subr.mxu0 0.0
        %1064 = vmatpush1.msra.mxu0 0.0
        %1065 = vmatprep.subr.mxu0 0.0
        %1066 = vmatpush1.msra.mxu0 0.0
        %1067 = vmatprep.subr.mxu0 0.0
        %1068 = vmatpush1.msra.mxu0 0.0
        %1069 = vmatprep.subr.mxu0 0.0
        %1070 = vmatpush1.msra.mxu0 0.0
        %1071 = vmatprep.subr.mxu0 0.0
        %1072 = vmatpush1.msra.mxu0 0.0
        %1073 = vmatprep.subr.mxu0 0.0
        %1074 = vmatpush1.msra.mxu0 0.0
        %1075 = vmatprep.subr.mxu0 0.0
        %1076 = vmatpush1.msra.mxu0 0.0
        %1077 = vmatprep.subr.mxu0 0.0
        %1078 = vmatpush1.msra.mxu0 0.0
        %1079 = vmatprep.subr.mxu0 0.0
        %1080 = vmatpush1.msra.mxu0 0.0
        %1081 = vmatprep.subr.mxu0 0.0
        %1082 = vmatpush1.msra.mxu0 0.0
        %1083 = vmatprep.subr.mxu0 0.0
        %1084 = vmatpush1.msra.mxu0 0.0
        %1085 = vmatprep.subr.mxu0 0.0
        %1086 = vmatpush1.msra.mxu0 0.0
        %1087 = vmatprep.subr.mxu0 0.0
        %1088 = vmatpush1.msra.mxu0 0.0
        %1089 = vmatprep.subr.mxu0 0.0
        %1090 = vmatpush1.msra.mxu0 0.0
        %1091 = vmatprep.subr.mxu0 0.0
        %1092 = vmatpush1.msra.mxu0 0.0
        %1093 = vmatprep.subr.mxu0 0.0
        %1094 = vmatpush1.msra.mxu0 0.0
        %1095 = vmatprep.subr.mxu0 0.0
        %1096 = vmatpush1.msra.mxu0 0.0
        %1097 = vmatprep.subr.mxu0 0.0
        %1098 = vmatpush1.msra.mxu0 0.0
        %1099 = vmatprep.subr.mxu0 0.0
        %1100 = vmatpush1.msra.mxu0 0.0
        %1101 = vmatprep.subr.mxu0 0.0
        %1102 = vmatpush1.msra.mxu0 0.0
        %1103 = vmatprep.subr.mxu0 0.0
        %1104 = vmatpush1.msra.mxu0 0.0
        %1105 = vmatprep.subr.mxu0 0.0
        %1106 = vmatpush1.msra.mxu0 0.0
        %1107 = vmatprep.mubr.f32.mxu0 0.0
        %1108 = vmatmul.mubr.f32.gmra.mrb[0].mxu0 %v271
        %v1109 = vpop.f32.mrb[0].mxu0
        %v1110 = vadd.f32 0.0, %v1109
        %v1111 = vpop.f32.mrb[0].mxu0
        %1112 = vdwg.mxu0
        %vm1113 = vcmask 130048
        %v1115 = vsel %vm1113, %v340, 0
        %v1118 = vsel %vm1113, %v620, 0
        %1120 = vmatprep.subr.mxu0 0.0
        %1121 = vmatpush1.xpose.msra.mxu0 %v1118
        %1122 = vmatprep.subr.mxu0 0.0
        %1123 = vmatpush1.xpose.msra.mxu0 0.0
        %1124 = vmatprep.subr.mxu0 0.0
        %1125 = vmatpush1.xpose.msra.mxu0 0.0
        %1126 = vmatprep.subr.mxu0 0.0
        %1127 = vmatpush1.xpose.msra.mxu0 0.0
        %1128 = vmatprep.subr.mxu0 0.0
        %1129 = vmatpush1.xpose.msra.mxu0 0.0
        %1130 = vmatprep.subr.mxu0 0.0
        %1131 = vmatpush1.xpose.msra.mxu0 0.0
        %1132 = vmatprep.subr.mxu0 0.0
        %1133 = vmatpush1.xpose.msra.mxu0 0.0
        %1134 = vmatprep.subr.mxu0 0.0
        %1135 = vmatpush1.xpose.msra.mxu0 0.0
        %1136 = vmatprep.subr.mxu0 0.0
        %1137 = vmatpush1.xpose.msra.mxu0 0.0
        %1138 = vmatprep.subr.mxu0 0.0
        %1139 = vmatpush1.xpose.msra.mxu0 0.0
        %1140 = vmatprep.subr.mxu0 0.0
        %1141 = vmatpush1.xpose.msra.mxu0 0.0
        %1142 = vmatprep.subr.mxu0 0.0
        %1143 = vmatpush1.xpose.msra.mxu0 0.0
        %1144 = vmatprep.subr.mxu0 0.0
        %1145 = vmatpush1.xpose.msra.mxu0 0.0
        %1146 = vmatprep.subr.mxu0 0.0
        %1147 = vmatpush1.xpose.msra.mxu0 0.0
        %1148 = vmatprep.subr.mxu0 0.0
        %1149 = vmatpush1.xpose.msra.mxu0 0.0
        %1150 = vmatprep.subr.mxu0 0.0
        %1151 = vmatpush1.xpose.msra.mxu0 0.0
        %1152 = vmatprep.subr.mxu0 0.0
        %1153 = vmatpush1.xpose.msra.mxu0 0.0
        %1154 = vmatprep.subr.mxu0 0.0
        %1155 = vmatpush1.xpose.msra.mxu0 0.0
        %1156 = vmatprep.subr.mxu0 0.0
        %1157 = vmatpush1.xpose.msra.mxu0 0.0
        %1158 = vmatprep.subr.mxu0 0.0
        %1159 = vmatpush1.xpose.msra.mxu0 0.0
        %1160 = vmatprep.subr.mxu0 0.0
        %1161 = vmatpush1.xpose.msra.mxu0 0.0
        %1162 = vmatprep.subr.mxu0 0.0
        %1163 = vmatpush1.xpose.msra.mxu0 0.0
        %1164 = vmatprep.subr.mxu0 0.0
        %1165 = vmatpush1.xpose.msra.mxu0 0.0
        %1166 = vmatprep.subr.mxu0 0.0
        %1167 = vmatpush1.xpose.msra.mxu0 0.0
        %1168 = vmatprep.subr.mxu0 0.0
        %1169 = vmatpush1.xpose.msra.mxu0 0.0
        %1170 = vmatprep.subr.mxu0 0.0
        %1171 = vmatpush1.xpose.msra.mxu0 0.0
        %1172 = vmatprep.subr.mxu0 0.0
        %1173 = vmatpush1.xpose.msra.mxu0 0.0
        %1174 = vmatprep.subr.mxu0 0.0
        %1175 = vmatpush1.xpose.msra.mxu0 0.0
        %1176 = vmatprep.subr.mxu0 0.0
        %1177 = vmatpush1.xpose.msra.mxu0 0.0
        %1178 = vmatprep.subr.mxu0 0.0
        %1179 = vmatpush1.xpose.msra.mxu0 0.0
        %1180 = vmatprep.subr.mxu0 0.0
        %1181 = vmatpush1.xpose.msra.mxu0 0.0
        %1182 = vmatprep.subr.mxu0 0.0
        %1183 = vmatpush1.xpose.msra.mxu0 0.0
        %1184 = vmatprep.mubr.f32.mxu0 0.0
        %1185 = vmatmul.mubr.f32.gmra.mrb[0].mxu0 %v1115
        %v1186 = vpop.f32.mrb[0].mxu0
        %v1187 = vadd.f32 0.0, %v1186
        %v1188 = vpop.f32.mrb[0].mxu0
        %1189 = vdwg.mxu0
        %v1191 = vsel %vm1113, %v410, 0
        %v1194 = vsel %vm1113, %v690, 0
        %1196 = vmatprep.subr.mxu0 0.0
        %1197 = vmatpush1.xpose.msra.mxu0 %v1194
        %1198 = vmatprep.subr.mxu0 0.0
        %1199 = vmatpush1.xpose.msra.mxu0 0.0
        %1200 = vmatprep.subr.mxu0 0.0
        %1201 = vmatpush1.xpose.msra.mxu0 0.0
        %1202 = vmatprep.subr.mxu0 0.0
        %1203 = vmatpush1.xpose.msra.mxu0 0.0
        %1204 = vmatprep.subr.mxu0 0.0
        %1205 = vmatpush1.xpose.msra.mxu0 0.0
        %1206 = vmatprep.subr.mxu0 0.0
        %1207 = vmatpush1.xpose.msra.mxu0 0.0
        %1208 = vmatprep.subr.mxu0 0.0
        %1209 = vmatpush1.xpose.msra.mxu0 0.0
        %1210 = vmatprep.subr.mxu0 0.0
        %1211 = vmatpush1.xpose.msra.mxu0 0.0
        %1212 = vmatprep.subr.mxu0 0.0
        %1213 = vmatpush1.xpose.msra.mxu0 0.0
        %1214 = vmatprep.subr.mxu0 0.0
        %1215 = vmatpush1.xpose.msra.mxu0 0.0
        %1216 = vmatprep.subr.mxu0 0.0
        %1217 = vmatpush1.xpose.msra.mxu0 0.0
        %1218 = vmatprep.subr.mxu0 0.0
        %1219 = vmatpush1.xpose.msra.mxu0 0.0
        %1220 = vmatprep.subr.mxu0 0.0
        %1221 = vmatpush1.xpose.msra.mxu0 0.0
        %1222 = vmatprep.subr.mxu0 0.0
        %1223 = vmatpush1.xpose.msra.mxu0 0.0
        %1224 = vmatprep.subr.mxu0 0.0
        %1225 = vmatpush1.xpose.msra.mxu0 0.0
        %1226 = vmatprep.subr.mxu0 0.0
        %1227 = vmatpush1.xpose.msra.mxu0 0.0
        %1228 = vmatprep.subr.mxu0 0.0
        %1229 = vmatpush1.xpose.msra.mxu0 0.0
        %1230 = vmatprep.subr.mxu0 0.0
        %1231 = vmatpush1.xpose.msra.mxu0 0.0
        %1232 = vmatprep.subr.mxu0 0.0
        %1233 = vmatpush1.xpose.msra.mxu0 0.0
        %1234 = vmatprep.subr.mxu0 0.0
        %1235 = vmatpush1.xpose.msra.mxu0 0.0
        %1236 = vmatprep.subr.mxu0 0.0
        %1237 = vmatpush1.xpose.msra.mxu0 0.0
        %1238 = vmatprep.subr.mxu0 0.0
        %1239 = vmatpush1.xpose.msra.mxu0 0.0
        %1240 = vmatprep.subr.mxu0 0.0
        %1241 = vmatpush1.xpose.msra.mxu0 0.0
        %1242 = vmatprep.subr.mxu0 0.0
        %1243 = vmatpush1.xpose.msra.mxu0 0.0
        %1244 = vmatprep.subr.mxu0 0.0
        %1245 = vmatpush1.xpose.msra.mxu0 0.0
        %1246 = vmatprep.subr.mxu0 0.0
        %1247 = vmatpush1.xpose.msra.mxu0 0.0
        %1248 = vmatprep.subr.mxu0 0.0
        %1249 = vmatpush1.xpose.msra.mxu0 0.0
        %1250 = vmatprep.subr.mxu0 0.0
        %1251 = vmatpush1.xpose.msra.mxu0 0.0
        %1252 = vmatprep.subr.mxu0 0.0
        %1253 = vmatpush1.xpose.msra.mxu0 0.0
        %1254 = vmatprep.subr.mxu0 0.0
        %1255 = vmatpush1.xpose.msra.mxu0 0.0
        %1256 = vmatprep.subr.mxu0 0.0
        %1257 = vmatpush1.xpose.msra.mxu0 0.0
        %1258 = vmatprep.subr.mxu0 0.0
        %1259 = vmatpush1.xpose.msra.mxu0 0.0
        %1260 = vmatprep.mubr.f32.mxu0 0.0
        %1261 = vmatmul.mubr.f32.gmra.mrb[0].mxu0 %v1191
        %v1262 = vpop.f32.mrb[0].mxu0
        %v1263 = vadd.f32 0.0, %v1262
        %v1264 = vpop.f32.mrb[0].mxu0
        %1265 = vdwg.mxu0
        %v1267 = vsel %vm1113, %v480, 0
        %v1270 = vsel %vm1113, %v760, 0
        %1272 = vmatprep.subr.mxu0 0.0
        %1273 = vmatpush1.xpose.msra.mxu0 %v1270
        %1274 = vmatprep.subr.mxu0 0.0
        %1275 = vmatpush1.xpose.msra.mxu0 0.0
        %1276 = vmatprep.subr.mxu0 0.0
        %1277 = vmatpush1.xpose.msra.mxu0 0.0
        %1278 = vmatprep.subr.mxu0 0.0
        %1279 = vmatpush1.xpose.msra.mxu0 0.0
        %1280 = vmatprep.subr.mxu0 0.0
        %1281 = vmatpush1.xpose.msra.mxu0 0.0
        %1282 = vmatprep.subr.mxu0 0.0
        %1283 = vmatpush1.xpose.msra.mxu0 0.0
        %1284 = vmatprep.subr.mxu0 0.0
        %1285 = vmatpush1.xpose.msra.mxu0 0.0
        %1286 = vmatprep.subr.mxu0 0.0
        %1287 = vmatpush1.xpose.msra.mxu0 0.0
        %1288 = vmatprep.subr.mxu0 0.0
        %1289 = vmatpush1.xpose.msra.mxu0 0.0
        %1290 = vmatprep.subr.mxu0 0.0
        %1291 = vmatpush1.xpose.msra.mxu0 0.0
        %1292 = vmatprep.subr.mxu0 0.0
        %1293 = vmatpush1.xpose.msra.mxu0 0.0
        %1294 = vmatprep.subr.mxu0 0.0
        %1295 = vmatpush1.xpose.msra.mxu0 0.0
        %1296 = vmatprep.subr.mxu0 0.0
        %1297 = vmatpush1.xpose.msra.mxu0 0.0
        %1298 = vmatprep.subr.mxu0 0.0
        %1299 = vmatpush1.xpose.msra.mxu0 0.0
        %1300 = vmatprep.subr.mxu0 0.0
        %1301 = vmatpush1.xpose.msra.mxu0 0.0
        %1302 = vmatprep.subr.mxu0 0.0
        %1303 = vmatpush1.xpose.msra.mxu0 0.0
        %1304 = vmatprep.subr.mxu0 0.0
        %1305 = vmatpush1.xpose.msra.mxu0 0.0
        %1306 = vmatprep.subr.mxu0 0.0
        %1307 = vmatpush1.xpose.msra.mxu0 0.0
        %1308 = vmatprep.subr.mxu0 0.0
        %1309 = vmatpush1.xpose.msra.mxu0 0.0
        %1310 = vmatprep.subr.mxu0 0.0
        %1311 = vmatpush1.xpose.msra.mxu0 0.0
        %1312 = vmatprep.subr.mxu0 0.0
        %1313 = vmatpush1.xpose.msra.mxu0 0.0
        %1314 = vmatprep.subr.mxu0 0.0
        %1315 = vmatpush1.xpose.msra.mxu0 0.0
        %1316 = vmatprep.subr.mxu0 0.0
        %1317 = vmatpush1.xpose.msra.mxu0 0.0
        %1318 = vmatprep.subr.mxu0 0.0
        %1319 = vmatpush1.xpose.msra.mxu0 0.0
        %1320 = vmatprep.subr.mxu0 0.0
        %1321 = vmatpush1.xpose.msra.mxu0 0.0
        %1322 = vmatprep.subr.mxu0 0.0
        %1323 = vmatpush1.xpose.msra.mxu0 0.0
        %1324 = vmatprep.subr.mxu0 0.0
        %1325 = vmatpush1.xpose.msra.mxu0 0.0
        %1326 = vmatprep.subr.mxu0 0.0
        %1327 = vmatpush1.xpose.msra.mxu0 0.0
        %1328 = vmatprep.subr.mxu0 0.0
        %1329 = vmatpush1.xpose.msra.mxu0 0.0
        %1330 = vmatprep.subr.mxu0 0.0
        %1331 = vmatpush1.xpose.msra.mxu0 0.0
        %1332 = vmatprep.subr.mxu0 0.0
        %1333 = vmatpush1.xpose.msra.mxu0 0.0
        %1334 = vmatprep.subr.mxu0 0.0
        %1335 = vmatpush1.xpose.msra.mxu0 0.0
        %1336 = vmatprep.mubr.f32.mxu0 0.0
        %1337 = vmatmul.mubr.f32.gmra.mrb[0].mxu0 %v1267
        %v1338 = vpop.f32.mrb[0].mxu0
        %v1339 = vadd.f32 0.0, %v1338
        %v1340 = vpop.f32.mrb[0].mxu0
        %1341 = vdwg.mxu0
        %v1343 = vsel %vm1113, %v550, 0
        %v1346 = vsel %vm1113, %v830, 0
        %1348 = vmatprep.subr.mxu0 0.0
        %1349 = vmatpush1.xpose.msra.mxu0 %v1346
        %1350 = vmatprep.subr.mxu0 0.0
        %1351 = vmatpush1.xpose.msra.mxu0 0.0
        %1352 = vmatprep.subr.mxu0 0.0
        %1353 = vmatpush1.xpose.msra.mxu0 0.0
        %1354 = vmatprep.subr.mxu0 0.0
        %1355 = vmatpush1.xpose.msra.mxu0 0.0
        %1356 = vmatprep.subr.mxu0 0.0
        %1357 = vmatpush1.xpose.msra.mxu0 0.0
        %1358 = vmatprep.subr.mxu0 0.0
        %1359 = vmatpush1.xpose.msra.mxu0 0.0
        %1360 = vmatprep.subr.mxu0 0.0
        %1361 = vmatpush1.xpose.msra.mxu0 0.0
        %1362 = vmatprep.subr.mxu0 0.0
        %1363 = vmatpush1.xpose.msra.mxu0 0.0
        %1364 = vmatprep.subr.mxu0 0.0
        %1365 = vmatpush1.xpose.msra.mxu0 0.0
        %1366 = vmatprep.subr.mxu0 0.0
        %1367 = vmatpush1.xpose.msra.mxu0 0.0
        %1368 = vmatprep.subr.mxu0 0.0
        %1369 = vmatpush1.xpose.msra.mxu0 0.0
        %1370 = vmatprep.subr.mxu0 0.0
        %1371 = vmatpush1.xpose.msra.mxu0 0.0
        %1372 = vmatprep.subr.mxu0 0.0
        %1373 = vmatpush1.xpose.msra.mxu0 0.0
        %1374 = vmatprep.subr.mxu0 0.0
        %1375 = vmatpush1.xpose.msra.mxu0 0.0
        %1376 = vmatprep.subr.mxu0 0.0
        %1377 = vmatpush1.xpose.msra.mxu0 0.0
        %1378 = vmatprep.subr.mxu0 0.0
        %1379 = vmatpush1.xpose.msra.mxu0 0.0
        %1380 = vmatprep.subr.mxu0 0.0
        %1381 = vmatpush1.xpose.msra.mxu0 0.0
        %1382 = vmatprep.subr.mxu0 0.0
        %1383 = vmatpush1.xpose.msra.mxu0 0.0
        %1384 = vmatprep.subr.mxu0 0.0
        %1385 = vmatpush1.xpose.msra.mxu0 0.0
        %1386 = vmatprep.subr.mxu0 0.0
        %1387 = vmatpush1.xpose.msra.mxu0 0.0
        %1388 = vmatprep.subr.mxu0 0.0
        %1389 = vmatpush1.xpose.msra.mxu0 0.0
        %1390 = vmatprep.subr.mxu0 0.0
        %1391 = vmatpush1.xpose.msra.mxu0 0.0
        %1392 = vmatprep.subr.mxu0 0.0
        %1393 = vmatpush1.xpose.msra.mxu0 0.0
        %1394 = vmatprep.subr.mxu0 0.0
        %1395 = vmatpush1.xpose.msra.mxu0 0.0
        %1396 = vmatprep.subr.mxu0 0.0
        %1397 = vmatpush1.xpose.msra.mxu0 0.0
        %1398 = vmatprep.subr.mxu0 0.0
        %1399 = vmatpush1.xpose.msra.mxu0 0.0
        %1400 = vmatprep.subr.mxu0 0.0
        %1401 = vmatpush1.xpose.msra.mxu0 0.0
        %1402 = vmatprep.subr.mxu0 0.0
        %1403 = vmatpush1.xpose.msra.mxu0 0.0
        %1404 = vmatprep.subr.mxu0 0.0
        %1405 = vmatpush1.xpose.msra.mxu0 0.0
        %1406 = vmatprep.subr.mxu0 0.0
        %1407 = vmatpush1.xpose.msra.mxu0 0.0
        %1408 = vmatprep.subr.mxu0 0.0
        %1409 = vmatpush1.xpose.msra.mxu0 0.0
        %1410 = vmatprep.subr.mxu0 0.0
        %1411 = vmatpush1.xpose.msra.mxu0 0.0
        %1412 = vmatprep.mubr.f32.mxu0 0.0
        %1413 = vmatmul.mubr.f32.gmra.mrb[0].mxu0 %v1343
        %v1414 = vpop.f32.mrb[0].mxu0
        %v1415 = vadd.f32 0.0, %v1414
        %v1416 = vpop.f32.mrb[0].mxu0
        %1417 = vdwg.mxu0
        %vm1418 = vcmask 64512
        %v1419 = vsel %vm1418, %v1187, -inf
        %1420 = vmax.xlane.f32.xlu0 %v1419
        %v1421 = vpop.xlane.xlu0 %1420
        %v1422 = vsel %vm1418, %v1263, -inf
        %1423 = vmax.xlane.f32.xlu0 %v1422
        %v1424 = vpop.xlane.xlu0 %1423
        %v1425 = vsel %vm1418, %v1339, -inf
        %1426 = vmax.xlane.f32.xlu0 %v1425
        %v1427 = vpop.xlane.xlu0 %1426
        %v1428 = vsel %vm1418, %v1415, -inf
        %1429 = vmax.xlane.f32.xlu0 %v1428
        %v1430 = vpop.xlane.xlu0 %1429
        %v1431 = vsub.f32 %v1187, %v1421
        %v1432 = vsub.f32 %v1263, %v1424
        %v1433 = vsub.f32 %v1339, %v1427
        %v1434 = vsub.f32 %v1415, %v1430
        %v1435 = vmul.f32 %v1431, 1.442695
        %v1436 = vpow.pop %v1435
        %v1437 = vmul.f32 %v1432, 1.442695
        %v1438 = vpow.pop %v1437
        %v1439 = vmul.f32 %v1433, 1.442695
        %v1440 = vpow.pop %v1439
        %v1441 = vmul.f32 %v1434, 1.442695
        %v1442 = vpow.pop %v1441
        %v1443 = vsel %vm1418, %v1436, 0.0
        %1444 = vadd.xlane.f32.xlu0 %v1443
        %v1445 = vpop.xlane.xlu0 %1444
        %v1446 = vsel %vm1418, %v1438, 0.0
        %1447 = vadd.xlane.f32.xlu0 %v1446
        %v1448 = vpop.xlane.xlu0 %1447
        %v1449 = vsel %vm1418, %v1440, 0.0
        %1450 = vadd.xlane.f32.xlu0 %v1449
        %v1451 = vpop.xlane.xlu0 %1450
        %v1452 = vsel %vm1418, %v1442, 0.0
        %1453 = vadd.xlane.f32.xlu0 %v1452
        %v1454 = vpop.xlane.xlu0 %1453
        %v1455 = vrcp.pop %v1445
        %v1456 = vrcp.pop %v1448
        %v1457 = vrcp.pop %v1451
        %v1458 = vrcp.pop %v1454
        %v1459 = vmul.f32 %v1436, %v1455
        %v1460 = vmul.f32 %v1438, %v1456
        %v1461 = vmul.f32 %v1440, %v1457
        %v1462 = vmul.f32 %v1442, %v1458
        %v1464 = vsel %vm1418, %v1459, 0
        %1466 = vmatprep.subr.mxu0 0.0
        %1467 = vmatpush1.msra.mxu0 %v900
        %1468 = vmatprep.subr.mxu0 0.0
        %1469 = vmatpush1.msra.mxu0 0.0
        %1470 = vmatprep.subr.mxu0 0.0
        %1471 = vmatpush1.msra.mxu0 0.0
        %1472 = vmatprep.subr.mxu0 0.0
        %1473 = vmatpush1.msra.mxu0 0.0
        %1474 = vmatprep.subr.mxu0 0.0
        %1475 = vmatpush1.msra.mxu0 0.0
        %1476 = vmatprep.subr.mxu0 0.0
        %1477 = vmatpush1.msra.mxu0 0.0
        %1478 = vmatprep.subr.mxu0 0.0
        %1479 = vmatpush1.msra.mxu0 0.0
        %1480 = vmatprep.subr.mxu0 0.0
        %1481 = vmatpush1.msra.mxu0 0.0
        %1482 = vmatprep.subr.mxu0 0.0
        %1483 = vmatpush1.msra.mxu0 0.0
        %1484 = vmatprep.subr.mxu0 0.0
        %1485 = vmatpush1.msra.mxu0 0.0
        %1486 = vmatprep.subr.mxu0 0.0
        %1487 = vmatpush1.msra.mxu0 0.0
        %1488 = vmatprep.subr.mxu0 0.0
        %1489 = vmatpush1.msra.mxu0 0.0
        %1490 = vmatprep.subr.mxu0 0.0
        %1491 = vmatpush1.msra.mxu0 0.0
        %1492 = vmatprep.subr.mxu0 0.0
        %1493 = vmatpush1.msra.mxu0 0.0
        %1494 = vmatprep.subr.mxu0 0.0
        %1495 = vmatpush1.msra.mxu0 0.0
        %1496 = vmatprep.subr.mxu0 0.0
        %1497 = vmatpush1.msra.mxu0 0.0
        %1498 = vmatprep.subr.mxu0 0.0
        %1499 = vmatpush1.msra.mxu0 0.0
        %1500 = vmatprep.subr.mxu0 0.0
        %1501 = vmatpush1.msra.mxu0 0.0
        %1502 = vmatprep.subr.mxu0 0.0
        %1503 = vmatpush1.msra.mxu0 0.0
        %1504 = vmatprep.subr.mxu0 0.0
        %1505 = vmatpush1.msra.mxu0 0.0
        %1506 = vmatprep.subr.mxu0 0.0
        %1507 = vmatpush1.msra.mxu0 0.0
        %1508 = vmatprep.subr.mxu0 0.0
        %1509 = vmatpush1.msra.mxu0 0.0
        %1510 = vmatprep.subr.mxu0 0.0
        %1511 = vmatpush1.msra.mxu0 0.0
        %1512 = vmatprep.subr.mxu0 0.0
        %1513 = vmatpush1.msra.mxu0 0.0
        %1514 = vmatprep.subr.mxu0 0.0
        %1515 = vmatpush1.msra.mxu0 0.0
        %1516 = vmatprep.subr.mxu0 0.0
        %1517 = vmatpush1.msra.mxu0 0.0
        %1518 = vmatprep.subr.mxu0 0.0
        %1519 = vmatpush1.msra.mxu0 0.0
        %1520 = vmatprep.subr.mxu0 0.0
        %1521 = vmatpush1.msra.mxu0 0.0
        %1522 = vmatprep.subr.mxu0 0.0
        %1523 = vmatpush1.msra.mxu0 0.0
        %1524 = vmatprep.subr.mxu0 0.0
        %1525 = vmatpush1.msra.mxu0 0.0
        %1526 = vmatprep.subr.mxu0 0.0
        %1527 = vmatpush1.msra.mxu0 0.0
        %1528 = vmatprep.subr.mxu0 0.0
        %1529 = vmatpush1.msra.mxu0 0.0
        %1530 = vmatprep.mubr.f32.mxu0 0.0
        %1531 = vmatmul.mubr.f32.gmra.mrb[0].mxu0 %v1464
        %v1532 = vpop.f32.mrb[0].mxu0
        %v1533 = vadd.f32 0.0, %v1532
        %v1534 = vpop.f32.mrb[0].mxu0
        %1535 = vdwg.mxu0
        %v1537 = vsel %vm1418, %v1460, 0
        %1539 = vmatprep.subr.mxu0 0.0
        %1540 = vmatpush1.msra.mxu0 %v970
        %1541 = vmatprep.subr.mxu0 0.0
        %1542 = vmatpush1.msra.mxu0 0.0
        %1543 = vmatprep.subr.mxu0 0.0
        %1544 = vmatpush1.msra.mxu0 0.0
        %1545 = vmatprep.subr.mxu0 0.0
        %1546 = vmatpush1.msra.mxu0 0.0
        %1547 = vmatprep.subr.mxu0 0.0
        %1548 = vmatpush1.msra.mxu0 0.0
        %1549 = vmatprep.subr.mxu0 0.0
        %1550 = vmatpush1.msra.mxu0 0.0
        %1551 = vmatprep.subr.mxu0 0.0
        %1552 = vmatpush1.msra.mxu0 0.0
        %1553 = vmatprep.subr.mxu0 0.0
        %1554 = vmatpush1.msra.mxu0 0.0
        %1555 = vmatprep.subr.mxu0 0.0
        %1556 = vmatpush1.msra.mxu0 0.0
        %1557 = vmatprep.subr.mxu0 0.0
        %1558 = vmatpush1.msra.mxu0 0.0
        %1559 = vmatprep.subr.mxu0 0.0
        %1560 = vmatpush1.msra.mxu0 0.0
        %1561 = vmatprep.subr.mxu0 0.0
        %1562 = vmatpush1.msra.mxu0 0.0
        %1563 = vmatprep.subr.mxu0 0.0
        %1564 = vmatpush1.msra.mxu0 0.0
        %1565 = vmatprep.subr.mxu0 0.0
        %1566 = vmatpush1.msra.mxu0 0.0
        %1567 = vmatprep.subr.mxu0 0.0
        %1568 = vmatpush1.msra.mxu0 0.0
        %1569 = vmatprep.subr.mxu0 0.0
        %1570 = vmatpush1.msra.mxu0 0.0
        %1571 = vmatprep.subr.mxu0 0.0
        %1572 = vmatpush1.msra.mxu0 0.0
        %1573 = vmatprep.subr.mxu0 0.0
        %1574 = vmatpush1.msra.mxu0 0.0
        %1575 = vmatprep.subr.mxu0 0.0
        %1576 = vmatpush1.msra.mxu0 0.0
        %1577 = vmatprep.subr.mxu0 0.0
        %1578 = vmatpush1.msra.mxu0 0.0
        %1579 = vmatprep.subr.mxu0 0.0
        %1580 = vmatpush1.msra.mxu0 0.0
        %1581 = vmatprep.subr.mxu0 0.0
        %1582 = vmatpush1.msra.mxu0 0.0
        %1583 = vmatprep.subr.mxu0 0.0
        %1584 = vmatpush1.msra.mxu0 0.0
        %1585 = vmatprep.subr.mxu0 0.0
        %1586 = vmatpush1.msra.mxu0 0.0
        %1587 = vmatprep.subr.mxu0 0.0
        %1588 = vmatpush1.msra.mxu0 0.0
        %1589 = vmatprep.subr.mxu0 0.0
        %1590 = vmatpush1.msra.mxu0 0.0
        %1591 = vmatprep.subr.mxu0 0.0
        %1592 = vmatpush1.msra.mxu0 0.0
        %1593 = vmatprep.subr.mxu0 0.0
        %1594 = vmatpush1.msra.mxu0 0.0
        %1595 = vmatprep.subr.mxu0 0.0
        %1596 = vmatpush1.msra.mxu0 0.0
        %1597 = vmatprep.subr.mxu0 0.0
        %1598 = vmatpush1.msra.mxu0 0.0
        %1599 = vmatprep.subr.mxu0 0.0
        %1600 = vmatpush1.msra.mxu0 0.0
        %1601 = vmatprep.subr.mxu0 0.0
        %1602 = vmatpush1.msra.mxu0 0.0
        %1603 = vmatprep.mubr.f32.mxu0 0.0
        %1604 = vmatmul.mubr.f32.gmra.mrb[0].mxu0 %v1537
        %v1605 = vpop.f32.mrb[0].mxu0
        %v1606 = vadd.f32 0.0, %v1605
        %v1607 = vpop.f32.mrb[0].mxu0
        %1608 = vdwg.mxu0
        %v1610 = vsel %vm1418, %v1461, 0
        %1612 = vmatprep.subr.mxu0 0.0
        %1613 = vmatpush1.msra.mxu0 %v1040
        %1614 = vmatprep.subr.mxu0 0.0
        %1615 = vmatpush1.msra.mxu0 0.0
        %1616 = vmatprep.subr.mxu0 0.0
        %1617 = vmatpush1.msra.mxu0 0.0
        %1618 = vmatprep.subr.mxu0 0.0
        %1619 = vmatpush1.msra.mxu0 0.0
        %1620 = vmatprep.subr.mxu0 0.0
        %1621 = vmatpush1.msra.mxu0 0.0
        %1622 = vmatprep.subr.mxu0 0.0
        %1623 = vmatpush1.msra.mxu0 0.0
        %1624 = vmatprep.subr.mxu0 0.0
        %1625 = vmatpush1.msra.mxu0 0.0
        %1626 = vmatprep.subr.mxu0 0.0
        %1627 = vmatpush1.msra.mxu0 0.0
        %1628 = vmatprep.subr.mxu0 0.0
        %1629 = vmatpush1.msra.mxu0 0.0
        %1630 = vmatprep.subr.mxu0 0.0
        %1631 = vmatpush1.msra.mxu0 0.0
        %1632 = vmatprep.subr.mxu0 0.0
        %1633 = vmatpush1.msra.mxu0 0.0
        %1634 = vmatprep.subr.mxu0 0.0
        %1635 = vmatpush1.msra.mxu0 0.0
        %1636 = vmatprep.subr.mxu0 0.0
        %1637 = vmatpush1.msra.mxu0 0.0
        %1638 = vmatprep.subr.mxu0 0.0
        %1639 = vmatpush1.msra.mxu0 0.0
        %1640 = vmatprep.subr.mxu0 0.0
        %1641 = vmatpush1.msra.mxu0 0.0
        %1642 = vmatprep.subr.mxu0 0.0
        %1643 = vmatpush1.msra.mxu0 0.0
        %1644 = vmatprep.subr.mxu0 0.0
        %1645 = vmatpush1.msra.mxu0 0.0
        %1646 = vmatprep.subr.mxu0 0.0
        %1647 = vmatpush1.msra.mxu0 0.0
        %1648 = vmatprep.subr.mxu0 0.0
        %1649 = vmatpush1.msra.mxu0 0.0
        %1650 = vmatprep.subr.mxu0 0.0
        %1651 = vmatpush1.msra.mxu0 0.0
        %1652 = vmatprep.subr.mxu0 0.0
        %1653 = vmatpush1.msra.mxu0 0.0
        %1654 = vmatprep.subr.mxu0 0.0
        %1655 = vmatpush1.msra.mxu0 0.0
        %1656 = vmatprep.subr.mxu0 0.0
        %1657 = vmatpush1.msra.mxu0 0.0
        %1658 = vmatprep.subr.mxu0 0.0
        %1659 = vmatpush1.msra.mxu0 0.0
        %1660 = vmatprep.subr.mxu0 0.0
        %1661 = vmatpush1.msra.mxu0 0.0
        %1662 = vmatprep.subr.mxu0 0.0
        %1663 = vmatpush1.msra.mxu0 0.0
        %1664 = vmatprep.subr.mxu0 0.0
        %1665 = vmatpush1.msra.mxu0 0.0
        %1666 = vmatprep.subr.mxu0 0.0
        %1667 = vmatpush1.msra.mxu0 0.0
        %1668 = vmatprep.subr.mxu0 0.0
        %1669 = vmatpush1.msra.mxu0 0.0
        %1670 = vmatprep.subr.mxu0 0.0
        %1671 = vmatpush1.msra.mxu0 0.0
        %1672 = vmatprep.subr.mxu0 0.0
        %1673 = vmatpush1.msra.mxu0 0.0
        %1674 = vmatprep.subr.mxu0 0.0
        %1675 = vmatpush1.msra.mxu0 0.0
        %1676 = vmatprep.mubr.f32.mxu0 0.0
        %1677 = vmatmul.mubr.f32.gmra.mrb[0].mxu0 %v1610
        %v1678 = vpop.f32.mrb[0].mxu0
        %v1679 = vadd.f32 0.0, %v1678
        %v1680 = vpop.f32.mrb[0].mxu0
        %1681 = vdwg.mxu0
        %v1683 = vsel %vm1418, %v1462, 0
        %1685 = vmatprep.subr.mxu0 0.0
        %1686 = vmatpush1.msra.mxu0 %v1110
        %1687 = vmatprep.subr.mxu0 0.0
        %1688 = vmatpush1.msra.mxu0 0.0
        %1689 = vmatprep.subr.mxu0 0.0
        %1690 = vmatpush1.msra.mxu0 0.0
        %1691 = vmatprep.subr.mxu0 0.0
        %1692 = vmatpush1.msra.mxu0 0.0
        %1693 = vmatprep.subr.mxu0 0.0
        %1694 = vmatpush1.msra.mxu0 0.0
        %1695 = vmatprep.subr.mxu0 0.0
        %1696 = vmatpush1.msra.mxu0 0.0
        %1697 = vmatprep.subr.mxu0 0.0
        %1698 = vmatpush1.msra.mxu0 0.0
        %1699 = vmatprep.subr.mxu0 0.0
        %1700 = vmatpush1.msra.mxu0 0.0
        %1701 = vmatprep.subr.mxu0 0.0
        %1702 = vmatpush1.msra.mxu0 0.0
        %1703 = vmatprep.subr.mxu0 0.0
        %1704 = vmatpush1.msra.mxu0 0.0
        %1705 = vmatprep.subr.mxu0 0.0
        %1706 = vmatpush1.msra.mxu0 0.0
        %1707 = vmatprep.subr.mxu0 0.0
        %1708 = vmatpush1.msra.mxu0 0.0
        %1709 = vmatprep.subr.mxu0 0.0
        %1710 = vmatpush1.msra.mxu0 0.0
        %1711 = vmatprep.subr.mxu0 0.0
        %1712 = vmatpush1.msra.mxu0 0.0
        %1713 = vmatprep.subr.mxu0 0.0
        %1714 = vmatpush1.msra.mxu0 0.0
        %1715 = vmatprep.subr.mxu0 0.0
        %1716 = vmatpush1.msra.mxu0 0.0
        %1717 = vmatprep.subr.mxu0 0.0
        %1718 = vmatpush1.msra.mxu0 0.0
        %1719 = vmatprep.subr.mxu0 0.0
        %1720 = vmatpush1.msra.mxu0 0.0
        %1721 = vmatprep.subr.mxu0 0.0
        %1722 = vmatpush1.msra.mxu0 0.0
        %1723 = vmatprep.subr.mxu0 0.0
        %1724 = vmatpush1.msra.mxu0 0.0
        %1725 = vmatprep.subr.mxu0 0.0
        %1726 = vmatpush1.msra.mxu0 0.0
        %1727 = vmatprep.subr.mxu0 0.0
        %1728 = vmatpush1.msra.mxu0 0.0
        %1729 = vmatprep.subr.mxu0 0.0
        %1730 = vmatpush1.msra.mxu0 0.0
        %1731 = vmatprep.subr.mxu0 0.0
        %1732 = vmatpush1.msra.mxu0 0.0
        %1733 = vmatprep.subr.mxu0 0.0
        %1734 = vmatpush1.msra.mxu0 0.0
        %1735 = vmatprep.subr.mxu0 0.0
        %1736 = vmatpush1.msra.mxu0 0.0
        %1737 = vmatprep.subr.mxu0 0.0
        %1738 = vmatpush1.msra.mxu0 0.0
        %1739 = vmatprep.subr.mxu0 0.0
        %1740 = vmatpush1.msra.mxu0 0.0
        %1741 = vmatprep.subr.mxu0 0.0
        %1742 = vmatpush1.msra.mxu0 0.0
        %1743 = vmatprep.subr.mxu0 0.0
        %1744 = vmatpush1.msra.mxu0 0.0
        %1745 = vmatprep.subr.mxu0 0.0
        %1746 = vmatpush1.msra.mxu0 0.0
        %1747 = vmatprep.subr.mxu0 0.0
        %1748 = vmatpush1.msra.mxu0 0.0
        %1749 = vmatprep.mubr.f32.mxu0 0.0
        %1750 = vmatmul.mubr.f32.gmra.mrb[0].mxu0 %v1683
        %v1751 = vpop.f32.mrb[0].mxu0
        %v1752 = vadd.f32 0.0, %v1751
        %v1753 = vpop.f32.mrb[0].mxu0
        %1754 = vdwg.mxu0
        %v1755 = vld [vmem:[%s3] sm:$0xff]
        %v1756 = vld [vmem:[%s3 + $0x8] sm:$0xff]
        %v1757 = vld [vmem:[%s3 + $0x10] sm:$0xff]
        %v1758 = vld [vmem:[%s3 + $0x18] sm:$0xff]
        %v1759 = vld [vmem:[%s3 + $0x20] sm:$0xff]
        %v1760 = vld [vmem:[%s3 + $0x28] sm:$0xff]
        %v1761 = vld [vmem:[%s3 + $0x30] sm:$0xff]
        %v1762 = vld [vmem:[%s3 + $0x38] sm:$0xff]
        %v1764 = vsel %vm1113, %v1533, 0
        %1766 = vmatprep.subr.mxu0 0.0
        %1767 = vmatpush1.msra.mxu0 %v1755
        %1768 = vmatprep.subr.mxu0 0.0
        %1769 = vmatpush1.msra.mxu0 %v1756
        %1770 = vmatprep.subr.mxu0 0.0
        %1771 = vmatpush1.msra.mxu0 0.0
        %1772 = vmatprep.subr.mxu0 0.0
        %1773 = vmatpush1.msra.mxu0 0.0
        %1774 = vmatprep.subr.mxu0 0.0
        %1775 = vmatpush1.msra.mxu0 0.0
        %1776 = vmatprep.subr.mxu0 0.0
        %1777 = vmatpush1.msra.mxu0 0.0
        %1778 = vmatprep.subr.mxu0 0.0
        %1779 = vmatpush1.msra.mxu0 0.0
        %1780 = vmatprep.subr.mxu0 0.0
        %1781 = vmatpush1.msra.mxu0 0.0
        %1782 = vmatprep.subr.mxu0 0.0
        %1783 = vmatpush1.msra.mxu0 0.0
        %1784 = vmatprep.subr.mxu0 0.0
        %1785 = vmatpush1.msra.mxu0 0.0
        %1786 = vmatprep.subr.mxu0 0.0
        %1787 = vmatpush1.msra.mxu0 0.0
        %1788 = vmatprep.subr.mxu0 0.0
        %1789 = vmatpush1.msra.mxu0 0.0
        %1790 = vmatprep.subr.mxu0 0.0
        %1791 = vmatpush1.msra.mxu0 0.0
        %1792 = vmatprep.subr.mxu0 0.0
        %1793 = vmatpush1.msra.mxu0 0.0
        %1794 = vmatprep.subr.mxu0 0.0
        %1795 = vmatpush1.msra.mxu0 0.0
        %1796 = vmatprep.subr.mxu0 0.0
        %1797 = vmatpush1.msra.mxu0 0.0
        %1798 = vmatprep.subr.mxu0 0.0
        %1799 = vmatpush1.msra.mxu0 0.0
        %1800 = vmatprep.subr.mxu0 0.0
        %1801 = vmatpush1.msra.mxu0 0.0
        %1802 = vmatprep.subr.mxu0 0.0
        %1803 = vmatpush1.msra.mxu0 0.0
        %1804 = vmatprep.subr.mxu0 0.0
        %1805 = vmatpush1.msra.mxu0 0.0
        %1806 = vmatprep.subr.mxu0 0.0
        %1807 = vmatpush1.msra.mxu0 0.0
        %1808 = vmatprep.subr.mxu0 0.0
        %1809 = vmatpush1.msra.mxu0 0.0
        %1810 = vmatprep.subr.mxu0 0.0
        %1811 = vmatpush1.msra.mxu0 0.0
        %1812 = vmatprep.subr.mxu0 0.0
        %1813 = vmatpush1.msra.mxu0 0.0
        %1814 = vmatprep.subr.mxu0 0.0
        %1815 = vmatpush1.msra.mxu0 0.0
        %1816 = vmatprep.subr.mxu0 0.0
        %1817 = vmatpush1.msra.mxu0 0.0
        %1818 = vmatprep.subr.mxu0 0.0
        %1819 = vmatpush1.msra.mxu0 0.0
        %1820 = vmatprep.subr.mxu0 0.0
        %1821 = vmatpush1.msra.mxu0 0.0
        %1822 = vmatprep.subr.mxu0 0.0
        %1823 = vmatpush1.msra.mxu0 0.0
        %1824 = vmatprep.subr.mxu0 0.0
        %1825 = vmatpush1.msra.mxu0 0.0
        %1826 = vmatprep.subr.mxu0 0.0
        %1827 = vmatpush1.msra.mxu0 0.0
        %1828 = vmatprep.subr.mxu0 0.0
        %1829 = vmatpush1.msra.mxu0 0.0
        %1830 = vmatprep.mubr.f32.mxu0 0.0
        %1831 = vmatmul.mubr.f32.gmra.mrb[0].mxu0 %v1764
        %v1832 = vpop.f32.mrb[0].mxu0
        %v1833 = vadd.f32 0.0, %v1832
        %v1834 = vpop.f32.mrb[0].mxu0
        %1835 = vdwg.mxu0
        %v1837 = vsel %vm1113, %v1606, 0
        %1839 = vmatprep.subr.mxu0 0.0
        %1840 = vmatpush1.msra.mxu0 %v1757
        %1841 = vmatprep.subr.mxu0 0.0
        %1842 = vmatpush1.msra.mxu0 %v1758
        %1843 = vmatprep.subr.mxu0 0.0
        %1844 = vmatpush1.msra.mxu0 0.0
        %1845 = vmatprep.subr.mxu0 0.0
        %1846 = vmatpush1.msra.mxu0 0.0
        %1847 = vmatprep.subr.mxu0 0.0
        %1848 = vmatpush1.msra.mxu0 0.0
        %1849 = vmatprep.subr.mxu0 0.0
        %1850 = vmatpush1.msra.mxu0 0.0
        %1851 = vmatprep.subr.mxu0 0.0
        %1852 = vmatpush1.msra.mxu0 0.0
        %1853 = vmatprep.subr.mxu0 0.0
        %1854 = vmatpush1.msra.mxu0 0.0
        %1855 = vmatprep.subr.mxu0 0.0
        %1856 = vmatpush1.msra.mxu0 0.0
        %1857 = vmatprep.subr.mxu0 0.0
        %1858 = vmatpush1.msra.mxu0 0.0
        %1859 = vmatprep.subr.mxu0 0.0
        %1860 = vmatpush1.msra.mxu0 0.0
        %1861 = vmatprep.subr.mxu0 0.0
        %1862 = vmatpush1.msra.mxu0 0.0
        %1863 = vmatprep.subr.mxu0 0.0
        %1864 = vmatpush1.msra.mxu0 0.0
        %1865 = vmatprep.subr.mxu0 0.0
        %1866 = vmatpush1.msra.mxu0 0.0
        %1867 = vmatprep.subr.mxu0 0.0
        %1868 = vmatpush1.msra.mxu0 0.0
        %1869 = vmatprep.subr.mxu0 0.0
        %1870 = vmatpush1.msra.mxu0 0.0
        %1871 = vmatprep.subr.mxu0 0.0
        %1872 = vmatpush1.msra.mxu0 0.0
        %1873 = vmatprep.subr.mxu0 0.0
        %1874 = vmatpush1.msra.mxu0 0.0
        %1875 = vmatprep.subr.mxu0 0.0
        %1876 = vmatpush1.msra.mxu0 0.0
        %1877 = vmatprep.subr.mxu0 0.0
        %1878 = vmatpush1.msra.mxu0 0.0
        %1879 = vmatprep.subr.mxu0 0.0
        %1880 = vmatpush1.msra.mxu0 0.0
        %1881 = vmatprep.subr.mxu0 0.0
        %1882 = vmatpush1.msra.mxu0 0.0
        %1883 = vmatprep.subr.mxu0 0.0
        %1884 = vmatpush1.msra.mxu0 0.0
        %1885 = vmatprep.subr.mxu0 0.0
        %1886 = vmatpush1.msra.mxu0 0.0
        %1887 = vmatprep.subr.mxu0 0.0
        %1888 = vmatpush1.msra.mxu0 0.0
        %1889 = vmatprep.subr.mxu0 0.0
        %1890 = vmatpush1.msra.mxu0 0.0
        %1891 = vmatprep.subr.mxu0 0.0
        %1892 = vmatpush1.msra.mxu0 0.0
        %1893 = vmatprep.subr.mxu0 0.0
        %1894 = vmatpush1.msra.mxu0 0.0
        %1895 = vmatprep.subr.mxu0 0.0
        %1896 = vmatpush1.msra.mxu0 0.0
        %1897 = vmatprep.subr.mxu0 0.0
        %1898 = vmatpush1.msra.mxu0 0.0
        %1899 = vmatprep.subr.mxu0 0.0
        %1900 = vmatpush1.msra.mxu0 0.0
        %1901 = vmatprep.subr.mxu0 0.0
        %1902 = vmatpush1.msra.mxu0 0.0
        %1903 = vmatprep.mubr.f32.mxu0 0.0
        %1904 = vmatmul.mubr.f32.gmra.mrb[0].mxu0 %v1837
        %v1905 = vpop.f32.mrb[0].mxu0
        %v1906 = vadd.f32 0.0, %v1905
        %v1907 = vpop.f32.mrb[0].mxu0
        %1908 = vdwg.mxu0
        %v1910 = vsel %vm1113, %v1679, 0
        %1912 = vmatprep.subr.mxu0 0.0
        %1913 = vmatpush1.msra.mxu0 %v1759
        %1914 = vmatprep.subr.mxu0 0.0
        %1915 = vmatpush1.msra.mxu0 %v1760
        %1916 = vmatprep.subr.mxu0 0.0
        %1917 = vmatpush1.msra.mxu0 0.0
        %1918 = vmatprep.subr.mxu0 0.0
        %1919 = vmatpush1.msra.mxu0 0.0
        %1920 = vmatprep.subr.mxu0 0.0
        %1921 = vmatpush1.msra.mxu0 0.0
        %1922 = vmatprep.subr.mxu0 0.0
        %1923 = vmatpush1.msra.mxu0 0.0
        %1924 = vmatprep.subr.mxu0 0.0
        %1925 = vmatpush1.msra.mxu0 0.0
        %1926 = vmatprep.subr.mxu0 0.0
        %1927 = vmatpush1.msra.mxu0 0.0
        %1928 = vmatprep.subr.mxu0 0.0
        %1929 = vmatpush1.msra.mxu0 0.0
        %1930 = vmatprep.subr.mxu0 0.0
        %1931 = vmatpush1.msra.mxu0 0.0
        %1932 = vmatprep.subr.mxu0 0.0
        %1933 = vmatpush1.msra.mxu0 0.0
        %1934 = vmatprep.subr.mxu0 0.0
        %1935 = vmatpush1.msra.mxu0 0.0
        %1936 = vmatprep.subr.mxu0 0.0
        %1937 = vmatpush1.msra.mxu0 0.0
        %1938 = vmatprep.subr.mxu0 0.0
        %1939 = vmatpush1.msra.mxu0 0.0
        %1940 = vmatprep.subr.mxu0 0.0
        %1941 = vmatpush1.msra.mxu0 0.0
        %1942 = vmatprep.subr.mxu0 0.0
        %1943 = vmatpush1.msra.mxu0 0.0
        %1944 = vmatprep.subr.mxu0 0.0
        %1945 = vmatpush1.msra.mxu0 0.0
        %1946 = vmatprep.subr.mxu0 0.0
        %1947 = vmatpush1.msra.mxu0 0.0
        %1948 = vmatprep.subr.mxu0 0.0
        %1949 = vmatpush1.msra.mxu0 0.0
        %1950 = vmatprep.subr.mxu0 0.0
        %1951 = vmatpush1.msra.mxu0 0.0
        %1952 = vmatprep.subr.mxu0 0.0
        %1953 = vmatpush1.msra.mxu0 0.0
        %1954 = vmatprep.subr.mxu0 0.0
        %1955 = vmatpush1.msra.mxu0 0.0
        %1956 = vmatprep.subr.mxu0 0.0
        %1957 = vmatpush1.msra.mxu0 0.0
        %1958 = vmatprep.subr.mxu0 0.0
        %1959 = vmatpush1.msra.mxu0 0.0
        %1960 = vmatprep.subr.mxu0 0.0
        %1961 = vmatpush1.msra.mxu0 0.0
        %1962 = vmatprep.subr.mxu0 0.0
        %1963 = vmatpush1.msra.mxu0 0.0
        %1964 = vmatprep.subr.mxu0 0.0
        %1965 = vmatpush1.msra.mxu0 0.0
        %1966 = vmatprep.subr.mxu0 0.0
        %1967 = vmatpush1.msra.mxu0 0.0
        %1968 = vmatprep.subr.mxu0 0.0
        %1969 = vmatpush1.msra.mxu0 0.0
        %1970 = vmatprep.subr.mxu0 0.0
        %1971 = vmatpush1.msra.mxu0 0.0
        %1972 = vmatprep.subr.mxu0 0.0
        %1973 = vmatpush1.msra.mxu0 0.0
        %1974 = vmatprep.subr.mxu0 0.0
        %1975 = vmatpush1.msra.mxu0 0.0
        %1976 = vmatprep.mubr.f32.mxu0 0.0
        %1977 = vmatmul.mubr.f32.gmra.mrb[0].mxu0 %v1910
        %v1978 = vpop.f32.mrb[0].mxu0
        %v1979 = vadd.f32 0.0, %v1978
        %v1980 = vpop.f32.mrb[0].mxu0
        %1981 = vdwg.mxu0
        %v1983 = vsel %vm1113, %v1752, 0
        %1985 = vmatprep.subr.mxu0 0.0
        %1986 = vmatpush1.msra.mxu0 %v1761
        %1987 = vmatprep.subr.mxu0 0.0
        %1988 = vmatpush1.msra.mxu0 %v1762
        %1989 = vmatprep.subr.mxu0 0.0
        %1990 = vmatpush1.msra.mxu0 0.0
        %1991 = vmatprep.subr.mxu0 0.0
        %1992 = vmatpush1.msra.mxu0 0.0
        %1993 = vmatprep.subr.mxu0 0.0
        %1994 = vmatpush1.msra.mxu0 0.0
        %1995 = vmatprep.subr.mxu0 0.0
        %1996 = vmatpush1.msra.mxu0 0.0
        %1997 = vmatprep.subr.mxu0 0.0
        %1998 = vmatpush1.msra.mxu0 0.0
        %1999 = vmatprep.subr.mxu0 0.0
        %2000 = vmatpush1.msra.mxu0 0.0
        %2001 = vmatprep.subr.mxu0 0.0
        %2002 = vmatpush1.msra.mxu0 0.0
        %2003 = vmatprep.subr.mxu0 0.0
        %2004 = vmatpush1.msra.mxu0 0.0
        %2005 = vmatprep.subr.mxu0 0.0
        %2006 = vmatpush1.msra.mxu0 0.0
        %2007 = vmatprep.subr.mxu0 0.0
        %2008 = vmatpush1.msra.mxu0 0.0
        %2009 = vmatprep.subr.mxu0 0.0
        %2010 = vmatpush1.msra.mxu0 0.0
        %2011 = vmatprep.subr.mxu0 0.0
        %2012 = vmatpush1.msra.mxu0 0.0
        %2013 = vmatprep.subr.mxu0 0.0
        %2014 = vmatpush1.msra.mxu0 0.0
        %2015 = vmatprep.subr.mxu0 0.0
        %2016 = vmatpush1.msra.mxu0 0.0
        %2017 = vmatprep.subr.mxu0 0.0
        %2018 = vmatpush1.msra.mxu0 0.0
        %2019 = vmatprep.subr.mxu0 0.0
        %2020 = vmatpush1.msra.mxu0 0.0
        %2021 = vmatprep.subr.mxu0 0.0
        %2022 = vmatpush1.msra.mxu0 0.0
        %2023 = vmatprep.subr.mxu0 0.0
        %2024 = vmatpush1.msra.mxu0 0.0
        %2025 = vmatprep.subr.mxu0 0.0
        %2026 = vmatpush1.msra.mxu0 0.0
        %2027 = vmatprep.subr.mxu0 0.0
        %2028 = vmatpush1.msra.mxu0 0.0
        %2029 = vmatprep.subr.mxu0 0.0
        %2030 = vmatpush1.msra.mxu0 0.0
        %2031 = vmatprep.subr.mxu0 0.0
        %2032 = vmatpush1.msra.mxu0 0.0
        %2033 = vmatprep.subr.mxu0 0.0
        %2034 = vmatpush1.msra.mxu0 0.0
        %2035 = vmatprep.subr.mxu0 0.0
        %2036 = vmatpush1.msra.mxu0 0.0
        %2037 = vmatprep.subr.mxu0 0.0
        %2038 = vmatpush1.msra.mxu0 0.0
        %2039 = vmatprep.subr.mxu0 0.0
        %2040 = vmatpush1.msra.mxu0 0.0
        %2041 = vmatprep.subr.mxu0 0.0
        %2042 = vmatpush1.msra.mxu0 0.0
        %2043 = vmatprep.subr.mxu0 0.0
        %2044 = vmatpush1.msra.mxu0 0.0
        %2045 = vmatprep.subr.mxu0 0.0
        %2046 = vmatpush1.msra.mxu0 0.0
        %2047 = vmatprep.subr.mxu0 0.0
        %2048 = vmatpush1.msra.mxu0 0.0
        %2049 = vmatprep.mubr.f32.mxu0 0.0
        %2050 = vmatmul.mubr.f32.gmra.mrb[0].mxu0 %v1983
        %v2051 = vpop.f32.mrb[0].mxu0
        %v2052 = vadd.f32 0.0, %v2051
        %v2053 = vpop.f32.mrb[0].mxu0
        %2054 = vdwg.mxu0
        %v2055 = vsel %vm197, %v1833, 0.0
        %v2056 = vsel %vm197, %v1906, 0.0
        %v2057 = vadd.f32 %v2055, %v2056
        %v2058 = vsel %vm197, %v1979, 0.0
        %v2059 = vadd.f32 %v2057, %v2058
        %v2060 = vsel %vm197, %v2052, 0.0
        %v2061 = vadd.f32 %v2059, %v2060
        %v2062 = vlaneseq
        %v2063 = vshrl.u32 %v2062, 7
        %v2064 = vsub.s32 0, %v2063
        %v2065 = vrot.slane %v196, %v2064
        %v2066 = vadd.f32 %v2061, %v2065
        %2067 = vst.msk [vmem:[%s188] sm:$0xff] %vm197, %v2066
        %s2068 = sand.u32 %s115, 1
        %s2069 = scalar_lea.sflag [#allocation3], %s2068
        %s2070 = sand.u32 %s115, 1
        %s2071 = smul.addr %s2070, 8
        %s2072 = scalar_lea.vmem [#allocation2], %s2071
        // Predicated region
        $region37: #{attention_forward.1} parent=35 // pred_check
          %p2073 = pneg %p125
        $region38: #{attention_forward.1} parent=35 // pred_check_branch
          %2075 = sbr.rel (%p2073) target = $region40
        $region39: #{attention_forward.1} parent=35 // pred_region
          %s2077 = ssub.s32 128, 128
          %2078 = vsyncadd %s2069, %s2077
          %s2079 = smul.addr %s18, 128
          %s2080 = scalar_lea.hbm %s4, %s2079
          %s2082 = sshll.u32 %s2072, 4
          %s2083 = int_to_ptr.vmem [resolvable:$true] %s2082
          %2085 = dma.vmem_to_hbm [thread:$0]  %s2083, 128, %s2080, %s2069
        $region40: #{attention_forward.1} parent=35 // pred_fallthru
          _
      $region36: #{attention_forward.1} parent=5 // pred_fallthru
        _
      %p2086 = scmp.le.s32.totalorder 2, %s13
      // Predicated region
      $region41: #{attention_forward.1} parent=5 // pred_check
        %p2087 = pneg %p2086
      $region42: #{attention_forward.1} parent=5 // pred_check_branch
        %2089 = sbr.rel (%p2087) target = $region44
      $region43: #{attention_forward.1} parent=5 // pred_region
        %s2090 = ssub.s32 %s13, 2
        // Predicated region
        $region45: #{attention_forward.1} parent=43 // pred_check
          %p2091 = pneg %p131
        $region46: #{attention_forward.1} parent=43 // pred_check_branch
          %2093 = sbr.rel (%p2091) target = $region48
        $region47: #{attention_forward.1} parent=43 // pred_region
          %s2094 = sand.u32 %s116, 1
          %s2095 = scalar_lea.sflag [#allocation3], %s2094
          %s2096 = sand.u32 %s116, 1
          %s2097 = smul.addr %s2096, 8
          %s2098 = scalar_lea.vmem [#allocation2], %s2097
          %2099 = dma.done %s2095, 128
        $region48: #{attention_forward.1} parent=43 // pred_fallthru
          _
      $region44: #{attention_forward.1} parent=5 // pred_fallthru
        _
    $region6: #{attention_forward.1} parent=1 // loop_footer
      %s17 = sadd.s32 1, %s13
    $region7: #{attention_forward.1} parent=1 // loop_footer_branch
      %12 = sbr.rel target = $region3
    $region8: #{attention_forward.1} parent=1 // loop_exit
      _
    %2100 = vsyncpa [#allocation3], 1
    %s2101 = scalar_lea.sflag [#allocation3], 1
    %2102 = vsyncpa %s2101, 1

</llo_original>
